<compile_context>
chip_gen: v6e
topology: v6e:2x2x1
jax: 0.10.0
libtpu: 0.0.40
codegen_flags: <defaults>
</compile_context>

<pallas_src>
import jax
import jax.numpy as jnp
from jax.experimental import pallas as pl
from jax.experimental.pallas import tpu as pltpu


def attention_kernel(s_ref, enc_ref, w_ref, v_ref, out_ref):
    # s_ref:   [TB, s_dim]        batch tile of decoder state
    # enc_ref: [TB, L, H]         batch tile of encoder outputs
    # w_ref:   [H, s_dim + H]     nn.Linear(enc_hid+s_dim, enc_hid) weight (as-is)
    # v_ref:   [1, H]             nn.Linear(enc_hid, 1) weight (as-is)
    # out_ref: [TB, H]            context vectors (lane-dense slab)
    tb, L, H = enc_ref.shape
    s_dim = s_ref.shape[-1]

    enc = enc_ref[...]                         # [TB, L, H]
    w = w_ref[...]                             # [H, s_dim + H]
    w_s = w[:, :s_dim]                         # [H, s_dim]  (columns acting on s)
    w_e = w[:, s_dim:]                         # [H, H]      (columns acting on enc)

    # --- energy = tanh(cat(s, enc) @ W^T), split over W's columns -------------
    # One fused MXU matmul over all TB*L rows of the tile; contraction on the
    # second axis of both operands (== x @ W^T, no transposed weight copies).
    e_part = jax.lax.dot_general(
        enc.reshape(tb * L, H), w_e,
        (((1,), (1,)), ((), ())),
        preferred_element_type=jnp.float32).reshape(tb, L, H)
    s_part = jax.lax.dot_general(
        s_ref[...], w_s,
        (((1,), (1,)), ((), ())),
        preferred_element_type=jnp.float32)                      # [TB, H]
    energy = jnp.tanh(e_part + s_part[:, None, :])               # [TB, L, H]

    # --- attention logits = energy @ v^T, on the VPU (1 output column) --------
    logits = jnp.sum(energy * v_ref[...][None, :, :],
                     axis=-1, keepdims=True)                     # [TB, L, 1]

    # --- softmax over src_len (sublane axis), approx reciprocal on EUP --------
    m = jnp.max(logits, axis=1, keepdims=True)                   # [TB, 1, 1]
    p = jnp.exp(logits - m)                                      # [TB, L, 1]
    inv = pl.reciprocal(jnp.sum(p, axis=1, keepdims=True), approx=True)
    score = p * inv                                              # [TB, L, 1]

    # --- context = sum_l score[l] * enc[l]  (VPU multiply + sublane reduce) ---
    out_ref[...] = jnp.sum(score * enc, axis=1).astype(out_ref.dtype)  # [TB, H]


def _pick_batch_tile(B, L):
    # Target >= 256 fused matmul rows (TB * L) per grid step (covers the
    # 2x256x256 MXU on v6e/v7x; v5e's 128-row tile is covered a fortiori).
    # Keep the block's second-minor dim (TB) either == the padded batch or a
    # multiple of 8 so the (8, 128) BlockSpec constraint is satisfied.
    tb = max(1, 256 // max(L, 1))
    if tb >= B:
        return B
    tb = -(-tb // 8) * 8  # round up to a multiple of 8
    return B if tb >= B else tb


def attention_forward(s, enc_output, w_attn, w_v, *, tb=None):
    """s: [B, s_dim], enc_output: [B, L, H],
    w_attn: [H, s_dim + H] (nn.Linear weight, untransposed), w_v: [1, H]."""
    B, L, H = enc_output.shape
    s_dim = s.shape[-1]

    if tb is None:
        tb = _pick_batch_tile(B, L)

    # Pad the batch to a multiple of TB.  Padded rows (zero s / zero enc) give
    # a uniform softmax over zeros -> zero context, no NaNs; sliced off below.
    n_tiles = pl.cdiv(B, tb)
    bp = n_tiles * tb
    if bp != B:
        pad = bp - B
        s = jnp.pad(s, ((0, pad), (0, 0)))
        enc_output = jnp.pad(enc_output, ((0, pad), (0, 0), (0, 0)))

    out2d = pl.pallas_call(
        attention_kernel,
        out_shape=jax.ShapeDtypeStruct((bp, H), jnp.float32),
        grid_spec=pltpu.PrefetchScalarGridSpec(
            num_scalar_prefetch=0,
            grid=(n_tiles,),
            in_specs=[
                pl.BlockSpec((tb, s_dim), lambda b: (b, 0)),
                pl.BlockSpec((tb, L, H), lambda b: (b, 0, 0)),
                # Weights: constant-index, full-array blocks -> held resident.
                pl.BlockSpec((H, s_dim + H), lambda b: (0, 0)),
                pl.BlockSpec((1, H), lambda b: (0, 0)),
            ],
            out_specs=pl.BlockSpec((tb, H), lambda b: (b, 0)),
        ),
        compiler_params=pltpu.CompilerParams(
            dimension_semantics=("parallel",),
            vmem_limit_bytes=32 * 1024 * 1024,  # explicit (v7x has 64 MiB total)
        ),
    )(s, enc_output, w_attn, w_v)

    return out2d[:B].reshape(B, 1, H)


def attention_reference(s, enc_output, w_attn, w_v):
    """Pure-JAX reference mirroring the PyTorch forward exactly."""
    B, L, H = enc_output.shape
    s_rep = jnp.repeat(s[:, None, :], L, axis=1)                 # [B, L, s_dim]
    x = jnp.concatenate([s_rep, enc_output], axis=2)             # [B, L, s_dim+H]
    energy = jnp.tanh(jnp.einsum("blk,hk->blh", x, w_attn))      # [B, L, H]
    attention = jnp.einsum("blh,oh->blo", energy, w_v)[..., 0]   # [B, L]
    score = jax.nn.softmax(attention, axis=1)[:, None, :]        # [B, 1, L]
    return jnp.einsum("bol,blh->boh", score, enc_output)         # [B, 1, H]


if __name__ == "__main__":
    # Small shapes consistent with the module; B=64 so the batch-tiled grid
    # actually runs >1 step (TB = 32 -> TB*L = 256 fused matmul rows, grid=(2,)).
    B, L = 64, 8
    s_dim, enc_hid_dim = 32, 32

    key = jax.random.PRNGKey(0)
    k_s, k_enc, k_attn, k_v = jax.random.split(key, 4)

    s = jax.random.normal(k_s, (B, s_dim), dtype=jnp.float32)
    enc_output = jax.random.normal(k_enc, (B, L, enc_hid_dim), dtype=jnp.float32)

    # Deterministic parameter init (shapes per nn.Linear(enc_hid+s_dim, enc_hid)
    # and nn.Linear(enc_hid, 1), both bias-free).
    bound_attn = 1.0 / jnp.sqrt(jnp.float32(enc_hid_dim + s_dim))
    bound_v = 1.0 / jnp.sqrt(jnp.float32(enc_hid_dim))
    w_attn = jax.random.uniform(
        k_attn, (enc_hid_dim, enc_hid_dim + s_dim),
        minval=-bound_attn, maxval=bound_attn, dtype=jnp.float32)
    w_v = jax.random.uniform(
        k_v, (1, enc_hid_dim), minval=-bound_v, maxval=bound_v, dtype=jnp.float32)

    out = attention_forward(s, enc_output, w_attn, w_v)
    out = jax.block_until_ready(out)

    ref = attention_reference(s, enc_output, w_attn, w_v)
    assert out.shape == (B, 1, enc_hid_dim)
    # Tolerance loosened slightly vs exact math because the softmax denominator
    # uses the EUP approximate reciprocal (per perf review).
    assert jnp.allclose(out, ref, atol=2e-3, rtol=2e-3), "mismatch vs reference"

    print("KERNEL_OK")
</pallas_src>

<mosaic_0001>
module attributes {stable_mosaic.version = 11 : i64} {
  func.func @attention_kernel(%arg0: i32, %arg1: memref<32x32xf32, #tpu.memory_space<vmem>>, %arg2: memref<32x8x32xf32, #tpu.memory_space<vmem>>, %arg3: memref<32x64xf32, #tpu.memory_space<vmem>>, %arg4: memref<1x32xf32, #tpu.memory_space<vmem>>, %arg5: memref<32x32xf32, #tpu.memory_space<vmem>>) attributes {dimension_semantics = [#tpu.dimension_semantics<parallel>], iteration_bounds = array<i64: 2>, scalar_prefetch = 0 : i64, scratch_operands = 0 : i64, tpu.core_type = #tpu.core_type<tc>, window_params = [{transform_indices = @transform_0, window_bounds = array<i64: 32, 32>}, {transform_indices = @transform_1, window_bounds = array<i64: 32, 8, 32>}, {pipeline_mode = #tpu.pipeline_mode<synchronous>, transform_indices = @transform_2, window_bounds = array<i64: 32, 64>}, {pipeline_mode = #tpu.pipeline_mode<synchronous>, transform_indices = @transform_3, window_bounds = array<i64: 1, 32>}, {transform_indices = @transform_4, window_bounds = array<i64: 32, 32>}]} {
    %c0 = arith.constant 0 : index
    %c0_0 = arith.constant 0 : index
    %c0_1 = arith.constant 0 : index
    %0 = vector.load %arg2[%c0, %c0_0, %c0_1] : memref<32x8x32xf32, #tpu.memory_space<vmem>>, vector<32x8x32xf32>
    %c0_2 = arith.constant 0 : index
    %c0_3 = arith.constant 0 : index
    %1 = vector.load %arg3[%c0_2, %c0_3] : memref<32x64xf32, #tpu.memory_space<vmem>>, vector<32x64xf32>
    %2 = vector.extract_strided_slice %1 {offsets = [0, 0], sizes = [32, 32], strides = [1, 1]} : vector<32x64xf32> to vector<32x32xf32>
    %3 = vector.extract_strided_slice %1 {offsets = [0, 32], sizes = [32, 32], strides = [1, 1]} : vector<32x64xf32> to vector<32x32xf32>
    %4 = vector.shape_cast %0 : vector<32x8x32xf32> to vector<256x32xf32>
    %cst = arith.constant dense<0.000000e+00> : vector<256x32xf32>
    %5 = tpu.matmul %4, %3, %cst {dimension_numbers = #tpu.dot_dimension_numbers<[1], [1], [0], [0], [0, 0, 1, 0], [], []>} : vector<256x32xf32>, vector<32x32xf32>, vector<256x32xf32> -> vector<256x32xf32>
    %6 = vector.shape_cast %5 : vector<256x32xf32> to vector<32x8x32xf32>
    %c0_4 = arith.constant 0 : index
    %c0_5 = arith.constant 0 : index
    %7 = vector.load %arg1[%c0_4, %c0_5] : memref<32x32xf32, #tpu.memory_space<vmem>>, vector<32x32xf32>
    %cst_6 = arith.constant dense<0.000000e+00> : vector<32x32xf32>
    %8 = tpu.matmul %7, %2, %cst_6 {dimension_numbers = #tpu.dot_dimension_numbers<[1], [1], [0], [0], [0, 0, 1, 0], [], []>} : vector<32x32xf32>, vector<32x32xf32>, vector<32x32xf32> -> vector<32x32xf32>
    %9 = vector.shape_cast %8 : vector<32x32xf32> to vector<32x1x32xf32>
    %10 = vector.broadcast %9 : vector<32x1x32xf32> to vector<32x8x32xf32>
    %11 = arith.addf %6, %10 : vector<32x8x32xf32>
    %12 = math.tanh %11 : vector<32x8x32xf32>
    %c0_7 = arith.constant 0 : index
    %c0_8 = arith.constant 0 : index
    %13 = vector.load %arg4[%c0_7, %c0_8] : memref<1x32xf32, #tpu.memory_space<vmem>>, vector<1x32xf32>
    %14 = vector.shape_cast %13 : vector<1x32xf32> to vector<1x1x32xf32>
    %15 = vector.broadcast %14 : vector<1x1x32xf32> to vector<32x8x32xf32>
    %16 = arith.mulf %12, %15 : vector<32x8x32xf32>
    %cst_9 = arith.constant dense<0.000000e+00> : vector<32x8xf32>
    %17 = vector.multi_reduction <add>, %16, %cst_9 [2] : vector<32x8x32xf32> to vector<32x8xf32>
    %18 = vector.shape_cast %17 : vector<32x8xf32> to vector<32x8x1xf32>
    %cst_10 = arith.constant dense<0xFF800000> : vector<32x1xf32>
    %19 = vector.multi_reduction <maximumf>, %18, %cst_10 [1] : vector<32x8x1xf32> to vector<32x1xf32>
    %20 = vector.shape_cast %19 : vector<32x1xf32> to vector<32x1x1xf32>
    %21 = vector.broadcast %20 : vector<32x1x1xf32> to vector<32x8x1xf32>
    %22 = arith.subf %18, %21 : vector<32x8x1xf32>
    %23 = math.exp %22 : vector<32x8x1xf32>
    %cst_11 = arith.constant dense<0.000000e+00> : vector<32x1xf32>
    %24 = vector.multi_reduction <add>, %23, %cst_11 [1] : vector<32x8x1xf32> to vector<32x1xf32>
    %25 = vector.shape_cast %24 : vector<32x1xf32> to vector<32x1x1xf32>
    %26 = tpu.reciprocal %25 {approx = true} : vector<32x1x1xf32> -> vector<32x1x1xf32>
    %27 = vector.broadcast %26 : vector<32x1x1xf32> to vector<32x8x1xf32>
    %28 = arith.mulf %23, %27 : vector<32x8x1xf32>
    %29 = vector.broadcast %28 : vector<32x8x1xf32> to vector<32x8x32xf32>
    %30 = arith.mulf %29, %0 : vector<32x8x32xf32>
    %cst_12 = arith.constant dense<0.000000e+00> : vector<32x32xf32>
    %31 = vector.multi_reduction <add>, %30, %cst_12 [1] : vector<32x8x32xf32> to vector<32x32xf32>
    %c0_13 = arith.constant 0 : index
    %c0_14 = arith.constant 0 : index
    %32 = vector.load %arg5[%c0_13, %c0_14] : memref<32x32xf32, #tpu.memory_space<vmem>>, vector<32x32xf32>
    tpu.vector_store %arg5[%c0_13, %c0_14], %31 {strides = array<i32>} : memref<32x32xf32, #tpu.memory_space<vmem>>, vector<32x32xf32>,
    return
  }
  func.func @transform_0(%arg0: i32) -> (i32, i32) {
    %c0_i32 = arith.constant 0 : i32
    %c0_i32_0 = arith.constant 0 : i32
    return %arg0, %c0_i32 : i32, i32
  }
  func.func @transform_1(%arg0: i32) -> (i32, i32, i32) {
    %c0_i32 = arith.constant 0 : i32
    %c0_i32_0 = arith.constant 0 : i32
    %c0_i32_1 = arith.constant 0 : i32
    return %arg0, %c0_i32, %c0_i32_0 : i32, i32, i32
  }
  func.func @transform_2(%arg0: i32) -> (i32, i32) {
    %c0_i32 = arith.constant 0 : i32
    %c0_i32_0 = arith.constant 0 : i32
    %c0_i32_1 = arith.constant 0 : i32
    return %c0_i32, %c0_i32_0 : i32, i32
  }
  func.func @transform_3(%arg0: i32) -> (i32, i32) {
    %c0_i32 = arith.constant 0 : i32
    %c0_i32_0 = arith.constant 0 : i32
    %c0_i32_1 = arith.constant 0 : i32
    return %c0_i32, %c0_i32_0 : i32, i32
  }
  func.func @transform_4(%arg0: i32) -> (i32, i32) {
    %c0_i32 = arith.constant 0 : i32
    %c0_i32_0 = arith.constant 0 : i32
    return %arg0, %c0_i32 : i32, i32
  }
}

</mosaic_0001>

<llo_original>
// kernel: tpu_custom_call.1
$region0: #{tpu_custom_call.1}
  #allocation0 [shape = 'u32[]', space=smem, size = 0x4, offset = 0x4, fixed_abs, tag = 'smem constant byte address 0x4 - core index']
  #allocation1 [shape = 'u32[144,128]{1,0:T(1,128)}', space=vmem, size = 0x12000, scoped, tag = 'internal scratch']
  %s0 = inlined_call_operand.vmem [shape: f32[64,32], index: 0, kind: input, shape index: {}]
  %s1 = inlined_call_operand.vmem [shape: f32[64,8,32], index: 1, kind: input, shape index: {}]
  %s2 = inlined_call_operand.vmem [shape: f32[32,64], index: 2, kind: input, shape index: {}]
  %s3 = inlined_call_operand.vmem [shape: f32[1,32], index: 3, kind: input, shape index: {}]
  %s4 = inlined_call_operand.vmem [shape: f32[64,32], index: 4, kind: output, shape index: {}]
  %s5 = sld [smem:[#allocation0]]
  $region49: #{tpu_custom_call.1} parent=0
    _
  %s7 = ssub.s32 1, %s5
  %s8 = scalar_select 0, %s7, %s5
  loop: start=0, step=1, limit=4
  $region2: #{tpu_custom_call.1} parent=0 // loop_pre_header
    _
  $region3: #{tpu_custom_call.1} parent=0 // loop_header
    %s10 = sphi 0, %s14
    %p11 = scmp.ge.s32.totalorder %s10, 4
    %s20 = sphi 0, %s22
    %s23 = sphi 0, %s20
    %s24 = sphi 0, %s23
    %s40 = sphi 0, %s24
    %s46 = sphi 0, %s48
    %s49 = sphi 0, %s46
    %s50 = sphi 0, %s49
    %s66 = sphi 0, %s50
    %s70 = sphi 0, %s70
    %s72 = sphi 0, %s70
    %s73 = sphi 0, %s72
    %s87 = sphi 0, %s73
    %s91 = sphi 0, %s91
    %s93 = sphi 0, %s91
    %s94 = sphi 0, %s93
    %s108 = sphi 0, %s94
    %s114 = sphi 0, %s116
    %s117 = sphi 0, %s114
    %s118 = sphi 0, %s117
    %s134 = sphi 0, %s118
  $region4: #{tpu_custom_call.1} parent=0 // loop_header_branch
    %13 = sbr.rel (%p11) target = $region8
  $region5: #{tpu_custom_call.1} parent=0 // loop_body
    %s15 = ssub.s32 %s10, 1
    %s16 = ssub.s32 %s10, 2
    %s17 = sadd.s32 %s10, 1
    %s18 = ssub.s32 %s10, %s17
    %p19 = scmp.eq.s32.totalorder %s18, 0
    %s21 = sadd.s32 %s20, 1
    %s22 = scalar_select %p19, %s20, %s21
    %p25 = pneg %p19
    %p26 = scmp.eq.s32.totalorder %s10, 1
    %p27 = por %p25, %p26
    %p28 = scmp.ne.s32.totalorder %s20, %s23
    %p29 = scmp.eq.s32.totalorder %s10, 0
    %p30 = por %p28, %p29
    %p31 = scmp.ne.s32.totalorder %s20, %s23
    %p32 = scmp.eq.s32.totalorder %s15, 1
    %p33 = por %p31, %p32
    %p34 = scmp.ne.s32.totalorder %s23, %s24
    %p35 = scmp.eq.s32.totalorder %s15, 0
    %p36 = por %p34, %p35
    %p37 = scmp.ne.s32.totalorder %s23, %s24
    %p38 = scmp.eq.s32.totalorder %s16, 1
    %p39 = por %p37, %p38
    %p41 = scmp.ne.s32.totalorder %s24, %s40
    %p42 = scmp.eq.s32.totalorder %s16, 0
    %p43 = por %p41, %p42
    %s44 = ssub.s32 %s10, %s17
    %p45 = scmp.eq.s32.totalorder %s44, 0
    %s47 = sadd.s32 %s46, 1
    %s48 = scalar_select %p45, %s46, %s47
    %p51 = pneg %p45
    %p52 = scmp.eq.s32.totalorder %s10, 1
    %p53 = por %p51, %p52
    %p54 = scmp.ne.s32.totalorder %s46, %s49
    %p55 = scmp.eq.s32.totalorder %s10, 0
    %p56 = por %p54, %p55
    %p57 = scmp.ne.s32.totalorder %s46, %s49
    %p58 = scmp.eq.s32.totalorder %s15, 1
    %p59 = por %p57, %p58
    %p60 = scmp.ne.s32.totalorder %s49, %s50
    %p61 = scmp.eq.s32.totalorder %s15, 0
    %p62 = por %p60, %p61
    %p63 = scmp.ne.s32.totalorder %s49, %s50
    %p64 = scmp.eq.s32.totalorder %s16, 1
    %p65 = por %p63, %p64
    %p67 = scmp.ne.s32.totalorder %s50, %s66
    %p68 = scmp.eq.s32.totalorder %s16, 0
    %p69 = por %p67, %p68
    %s71 = sadd.s32 %s70, 1
    %p74 = scmp.eq.s32.totalorder %s10, 1
    %p75 = scmp.ne.s32.totalorder %s70, %s72
    %p76 = scmp.eq.s32.totalorder %s10, 0
    %p77 = por %p75, %p76
    %p78 = scmp.ne.s32.totalorder %s70, %s72
    %p79 = scmp.eq.s32.totalorder %s15, 1
    %p80 = por %p78, %p79
    %p81 = scmp.ne.s32.totalorder %s72, %s73
    %p82 = scmp.eq.s32.totalorder %s15, 0
    %p83 = por %p81, %p82
    %p84 = scmp.ne.s32.totalorder %s72, %s73
    %p85 = scmp.eq.s32.totalorder %s16, 1
    %p86 = por %p84, %p85
    %p88 = scmp.ne.s32.totalorder %s73, %s87
    %p89 = scmp.eq.s32.totalorder %s16, 0
    %p90 = por %p88, %p89
    %s92 = sadd.s32 %s91, 1
    %p95 = scmp.eq.s32.totalorder %s10, 1
    %p96 = scmp.ne.s32.totalorder %s91, %s93
    %p97 = scmp.eq.s32.totalorder %s10, 0
    %p98 = por %p96, %p97
    %p99 = scmp.ne.s32.totalorder %s91, %s93
    %p100 = scmp.eq.s32.totalorder %s15, 1
    %p101 = por %p99, %p100
    %p102 = scmp.ne.s32.totalorder %s93, %s94
    %p103 = scmp.eq.s32.totalorder %s15, 0
    %p104 = por %p102, %p103
    %p105 = scmp.ne.s32.totalorder %s93, %s94
    %p106 = scmp.eq.s32.totalorder %s16, 1
    %p107 = por %p105, %p106
    %p109 = scmp.ne.s32.totalorder %s94, %s108
    %p110 = scmp.eq.s32.totalorder %s16, 0
    %p111 = por %p109, %p110
    %s112 = ssub.s32 %s10, %s17
    %p113 = scmp.eq.s32.totalorder %s112, 0
    %s115 = sadd.s32 %s114, 1
    %s116 = scalar_select %p113, %s114, %s115
    %p119 = pneg %p113
    %p120 = scmp.eq.s32.totalorder %s10, 1
    %p121 = por %p119, %p120
    %p122 = scmp.ne.s32.totalorder %s114, %s117
    %p123 = scmp.eq.s32.totalorder %s10, 0
    %p124 = por %p122, %p123
    %p125 = scmp.ne.s32.totalorder %s114, %s117
    %p126 = scmp.eq.s32.totalorder %s15, 1
    %p127 = por %p125, %p126
    %p128 = scmp.ne.s32.totalorder %s117, %s118
    %p129 = scmp.eq.s32.totalorder %s15, 0
    %p130 = por %p128, %p129
    %p131 = scmp.ne.s32.totalorder %s117, %s118
    %p132 = scmp.eq.s32.totalorder %s16, 1
    %p133 = por %p131, %p132
    %p135 = scmp.ne.s32.totalorder %s118, %s134
    %p136 = scmp.eq.s32.totalorder %s16, 0
    %p137 = por %p135, %p136
    %p138 = scmp.le.s32.totalorder 1, %s10
    %p139 = scmp.lt.s32.totalorder %s10, 3
    %p140 = pnand %p138, %p139
    %p141 = pneg %p140
    // Predicated region
    $region9: #{tpu_custom_call.1} parent=5 // pred_check
      _
    $region10: #{tpu_custom_call.1} parent=5 // pred_check_branch
      %143 = sbr.rel (%p140) target = $region12
    $region11: #{tpu_custom_call.1} parent=5 // pred_region
      %s144 = ssub.s32 %s10, 1
      // Predicated region
      $region13: #{tpu_custom_call.1} parent=11 // pred_check
        %p145 = pneg %p83
      $region14: #{tpu_custom_call.1} parent=11 // pred_check_branch
        %147 = sbr.rel (%p145) target = $region16
      $region15: #{tpu_custom_call.1} parent=11 // pred_region
        _
      $region16: #{tpu_custom_call.1} parent=11 // pred_fallthru
        _
      // Predicated region
      $region17: #{tpu_custom_call.1} parent=11 // pred_check
        %p148 = pneg %p104
      $region18: #{tpu_custom_call.1} parent=11 // pred_check_branch
        %150 = sbr.rel (%p148) target = $region20
      $region19: #{tpu_custom_call.1} parent=11 // pred_region
        _
      $region20: #{tpu_custom_call.1} parent=11 // pred_fallthru
        _
    $region12: #{tpu_custom_call.1} parent=5 // pred_fallthru
      _
    %p151 = scmp.lt.s32.totalorder %s10, 2
    // Predicated region
    $region21: #{tpu_custom_call.1} parent=5 // pred_check
      %p152 = pneg %p151
    $region22: #{tpu_custom_call.1} parent=5 // pred_check_branch
      %154 = sbr.rel (%p152) target = $region24
    $region23: #{tpu_custom_call.1} parent=5 // pred_region
      // Predicated region
      $region25: #{tpu_custom_call.1} parent=23 // pred_check
        %p155 = pneg %p30
      $region26: #{tpu_custom_call.1} parent=23 // pred_check_branch
        %157 = sbr.rel (%p155) target = $region28
      $region27: #{tpu_custom_call.1} parent=23 // pred_region
        %s158 = smul.u32 4, %s10
        %p159 = scmp.lt.s32.totalorder %s158, 7
        %s160 = scalar_select %p159, %s158, 7
        %s161 = smul.addr %s160, 8
        %s162 = scalar_lea.vmem %s0, %s161
        %s163 = smul.u32 4, %s10
      $region28: #{tpu_custom_call.1} parent=23 // pred_fallthru
        _
      // Predicated region
      $region29: #{tpu_custom_call.1} parent=23 // pred_check
        %p164 = pneg %p56
      $region30: #{tpu_custom_call.1} parent=23 // pred_check_branch
        %166 = sbr.rel (%p164) target = $region32
      $region31: #{tpu_custom_call.1} parent=23 // pred_region
        %s167 = smul.u32 32, %s10
        %p168 = scmp.lt.s32.totalorder %s167, 63
        %s169 = scalar_select %p168, %s167, 63
        %s170 = smul.addr %s169, 8
        %s171 = scalar_lea.vmem %s1, %s170
        %s172 = smul.u32 32, %s10
      $region32: #{tpu_custom_call.1} parent=23 // pred_fallthru
        _
    $region24: #{tpu_custom_call.1} parent=5 // pred_fallthru
      _
    %p173 = scmp.le.s32.totalorder 1, %s10
    %p174 = scmp.lt.s32.totalorder %s10, 3
    %p175 = pnand %p173, %p174
    %p176 = pneg %p175
    // Predicated region
    $region33: #{tpu_custom_call.1} parent=5 // pred_check
      _
    $region34: #{tpu_custom_call.1} parent=5 // pred_check_branch
      %178 = sbr.rel (%p175) target = $region36
    $region35: #{tpu_custom_call.1} parent=5 // pred_region
      %s179 = ssub.s32 %s10, 1
      %s180 = smul.u32 4, %s15
      %p181 = scmp.lt.s32.totalorder %s180, 7
      %s182 = scalar_select %p181, %s180, 7
      %s183 = smul.addr %s182, 8
      %s184 = scalar_lea.vmem %s0, %s183
      %p185 = pneg %p36
      %p186 = pneg %p33
      %s187 = smul.u32 32, %s15
      %p188 = scmp.lt.s32.totalorder %s187, 63
      %s189 = scalar_select %p188, %s187, 63
      %s190 = smul.addr %s189, 8
      %s191 = scalar_lea.vmem %s1, %s190
      %p192 = pneg %p62
      %p193 = pneg %p59
      %p194 = pneg %p83
      %p195 = pneg %p80
      %p196 = pneg %p104
      %p197 = pneg %p101
      %p198 = pneg %p130
      %p199 = pneg %p127
      %s200 = smul.u32 4, %s15
      %p201 = scmp.lt.s32.totalorder %s200, 7
      %s202 = scalar_select %p201, %s200, 7
      %s203 = smul.addr %s202, 8
      %s204 = scalar_lea.vmem %s4, %s203
      %s205 = smul.u32 4, %s15
      %p206 = scmp.lt.s32.totalorder %s205, 7
      %s207 = scalar_select %p206, %s205, 7
      %s208 = smul.addr %s207, 8
      %s209 = scalar_lea.vmem %s0, %s208
      %s210 = smul.u32 4, %s15
      %s211 = smul.u32 32, %s15
      %p212 = scmp.lt.s32.totalorder %s211, 63
      %s213 = scalar_select %p212, %s211, 63
      %s214 = smul.addr %s213, 8
      %s215 = scalar_lea.vmem %s1, %s214
      %s216 = smul.u32 32, %s15
      %s217 = smul.u32 4, %s15
      %p218 = scmp.lt.s32.totalorder %s217, 7
      %s219 = scalar_select %p218, %s217, 7
      %s220 = smul.addr %s219, 8
      %s221 = scalar_lea.vmem %s4, %s220
      %s222 = smul.u32 4, %s15
      %v223 = vld [vmem:[%s215] sm:$0xff]
      %v224 = vld [vmem:[%s215 + $0x8] sm:$0xff]
      %v225 = vld [vmem:[%s215 + $0x10] sm:$0xff]
      %v226 = vld [vmem:[%s215 + $0x18] sm:$0xff]
      %v227 = vld [vmem:[%s215 + $0x20] sm:$0xff]
      %v228 = vld [vmem:[%s215 + $0x28] sm:$0xff]
      %v229 = vld [vmem:[%s215 + $0x30] sm:$0xff]
      %v230 = vld [vmem:[%s215 + $0x38] sm:$0xff]
      %v231 = vld [vmem:[%s215 + $0x40] sm:$0xff]
      %v232 = vld [vmem:[%s215 + $0x48] sm:$0xff]
      %v233 = vld [vmem:[%s215 + $0x50] sm:$0xff]
      %v234 = vld [vmem:[%s215 + $0x58] sm:$0xff]
      %v235 = vld [vmem:[%s215 + $0x60] sm:$0xff]
      %v236 = vld [vmem:[%s215 + $0x68] sm:$0xff]
      %v237 = vld [vmem:[%s215 + $0x70] sm:$0xff]
      %v238 = vld [vmem:[%s215 + $0x78] sm:$0xff]
      %v239 = vld [vmem:[%s215 + $0x80] sm:$0xff]
      %v240 = vld [vmem:[%s215 + $0x88] sm:$0xff]
      %v241 = vld [vmem:[%s215 + $0x90] sm:$0xff]
      %v242 = vld [vmem:[%s215 + $0x98] sm:$0xff]
      %v243 = vld [vmem:[%s215 + $0xa0] sm:$0xff]
      %v244 = vld [vmem:[%s215 + $0xa8] sm:$0xff]
      %v245 = vld [vmem:[%s215 + $0xb0] sm:$0xff]
      %v246 = vld [vmem:[%s215 + $0xb8] sm:$0xff]
      %v247 = vld [vmem:[%s215 + $0xc0] sm:$0xff]
      %v248 = vld [vmem:[%s215 + $0xc8] sm:$0xff]
      %v249 = vld [vmem:[%s215 + $0xd0] sm:$0xff]
      %v250 = vld [vmem:[%s215 + $0xd8] sm:$0xff]
      %v251 = vld [vmem:[%s215 + $0xe0] sm:$0xff]
      %v252 = vld [vmem:[%s215 + $0xe8] sm:$0xff]
      %v253 = vld [vmem:[%s215 + $0xf0] sm:$0xff]
      %v254 = vld [vmem:[%s215 + $0xf8] sm:$0xff]
      %v255 = vld [vmem:[%s2] sm:$0xff]
      %v256 = vld [vmem:[%s2 + $0x8] sm:$0xff]
      %v257 = vld [vmem:[%s2 + $0x10] sm:$0xff]
      %v258 = vld [vmem:[%s2 + $0x18] sm:$0xff]
      %263 = vrot.lane.b32.xlu0 %v255, 96
      %v264 = vpop.permute.xlu0 %263
      %265 = vrot.lane.b32.xlu0 %v256, 96
      %v266 = vpop.permute.xlu0 %265
      %267 = vrot.lane.b32.xlu0 %v257, 96
      %v268 = vpop.permute.xlu0 %267
      %269 = vrot.lane.b32.xlu0 %v258, 96
      %v270 = vpop.permute.xlu0 %269
      %vm271 = vcmask 261120
      %v273 = vsel %vm271, %v223, 0
      %v276 = vsel %vm271, %v224, 0
      %v279 = vsel %vm271, %v225, 0
      %v282 = vsel %vm271, %v226, 0
      %v285 = vsel %vm271, %v227, 0
      %v288 = vsel %vm271, %v228, 0
      %v291 = vsel %vm271, %v229, 0
      %v294 = vsel %vm271, %v230, 0
      %v297 = vsel %vm271, %v231, 0
      %v300 = vsel %vm271, %v232, 0
      %v303 = vsel %vm271, %v233, 0
      %v306 = vsel %vm271, %v234, 0
      %v309 = vsel %vm271, %v235, 0
      %v312 = vsel %vm271, %v236, 0
      %v315 = vsel %vm271, %v237, 0
      %v318 = vsel %vm271, %v238, 0
      %v321 = vsel %vm271, %v239, 0
      %v324 = vsel %vm271, %v240, 0
      %v327 = vsel %vm271, %v241, 0
      %v330 = vsel %vm271, %v242, 0
      %v333 = vsel %vm271, %v243, 0
      %v336 = vsel %vm271, %v244, 0
      %v339 = vsel %vm271, %v245, 0
      %v342 = vsel %vm271, %v246, 0
      %v345 = vsel %vm271, %v247, 0
      %v348 = vsel %vm271, %v248, 0
      %v351 = vsel %vm271, %v249, 0
      %v354 = vsel %vm271, %v250, 0
      %v357 = vsel %vm271, %v251, 0
      %v360 = vsel %vm271, %v252, 0
      %v363 = vsel %vm271, %v253, 0
      %v366 = vsel %vm271, %v254, 0
      %v368 = vsel %vm271, %v264, 0
      %v370 = vsel %vm271, %v266, 0
      %v372 = vsel %vm271, %v268, 0
      %v374 = vsel %vm271, %v270, 0
      %376 = vmatprep.subr.mxu0 0.0
      %377 = vmatpush1.xpose.msra.mxu0 0.0
      %378 = vmatprep.subr.mxu0 0.0
      %379 = vmatpush1.xpose.msra.mxu0 0.0
      %380 = vmatprep.subr.mxu0 0.0
      %381 = vmatpush1.xpose.msra.mxu0 0.0
      %382 = vmatprep.subr.mxu0 0.0
      %383 = vmatpush1.xpose.msra.mxu0 0.0
      %384 = vmatprep.subr.mxu0 0.0
      %385 = vmatpush1.xpose.msra.mxu0 0.0
      %386 = vmatprep.subr.mxu0 0.0
      %387 = vmatpush1.xpose.msra.mxu0 0.0
      %388 = vmatprep.subr.mxu0 0.0
      %389 = vmatpush1.xpose.msra.mxu0 0.0
      %390 = vmatprep.subr.mxu0 0.0
      %391 = vmatpush1.xpose.msra.mxu0 0.0
      %392 = vmatprep.subr.mxu0 0.0
      %393 = vmatpush1.xpose.msra.mxu0 0.0
      %394 = vmatprep.subr.mxu0 0.0
      %395 = vmatpush1.xpose.msra.mxu0 0.0
      %396 = vmatprep.subr.mxu0 0.0
      %397 = vmatpush1.xpose.msra.mxu0 0.0
      %398 = vmatprep.subr.mxu0 0.0
      %399 = vmatpush1.xpose.msra.mxu0 0.0
      %400 = vmatprep.subr.mxu0 0.0
      %401 = vmatpush1.xpose.msra.mxu0 %v374
      %402 = vmatprep.subr.mxu0 0.0
      %403 = vmatpush1.xpose.msra.mxu0 %v372
      %404 = vmatprep.subr.mxu0 0.0
      %405 = vmatpush1.xpose.msra.mxu0 %v370
      %406 = vmatprep.subr.mxu0 0.0
      %407 = vmatpush1.xpose.msra.mxu0 %v368
      %408 = vmatprep.subr.mxu0 0.0
      %409 = vmatpush2.xpose.msra.mxu0 0.0
      %410 = vmatprep.subr.mxu0 0.0
      %411 = vmatpush2.xpose.msra.mxu0 0.0
      %412 = vmatprep.subr.mxu0 0.0
      %413 = vmatpush2.xpose.msra.mxu0 0.0
      %414 = vmatprep.subr.mxu0 0.0
      %415 = vmatpush2.xpose.msra.mxu0 0.0
      %416 = vmatprep.subr.mxu0 0.0
      %417 = vmatpush2.xpose.msra.mxu0 0.0
      %418 = vmatprep.subr.mxu0 0.0
      %419 = vmatpush2.xpose.msra.mxu0 0.0
      %420 = vmatprep.subr.mxu0 0.0
      %421 = vmatpush2.xpose.msra.mxu0 0.0
      %422 = vmatprep.subr.mxu0 0.0
      %423 = vmatpush2.xpose.msra.mxu0 0.0
      %424 = vmatprep.subr.mxu0 0.0
      %425 = vmatpush2.xpose.msra.mxu0 0.0
      %426 = vmatprep.subr.mxu0 0.0
      %427 = vmatpush2.xpose.msra.mxu0 0.0
      %428 = vmatprep.subr.mxu0 0.0
      %429 = vmatpush2.xpose.msra.mxu0 0.0
      %430 = vmatprep.subr.mxu0 0.0
      %431 = vmatpush2.xpose.msra.mxu0 0.0
      %432 = vmatprep.subr.mxu0 0.0
      %433 = vmatpush2.xpose.msra.mxu0 0.0
      %434 = vmatprep.subr.mxu0 0.0
      %435 = vmatpush2.xpose.msra.mxu0 0.0
      %436 = vmatprep.subr.mxu0 0.0
      %437 = vmatpush2.xpose.msra.mxu0 0.0
      %438 = vmatprep.subr.mxu0 0.0
      %439 = vmatpush2.xpose.msra.mxu0 0.0
      %440 = vmatprep.mubr.f32.mxu0 0.0
      %441 = vmatmul.mubr.f32.gmra.mxu0 %v273
      %v442 = vpop.f32.mrf.mxu0
      %v443 = vadd.f32 0.0, %v442
      %v444 = vpop.f32.mrf.mxu0
      %445 = vmatprep.mubr.f32.mxu0 0.0
      %446 = vmatmul.mubr.f32.gmra.mxu0 %v276
      %v447 = vpop.f32.mrf.mxu0
      %v448 = vadd.f32 0.0, %v447
      %v449 = vpop.f32.mrf.mxu0
      %450 = vmatprep.mubr.f32.mxu0 0.0
      %451 = vmatmul.mubr.f32.gmra.mxu0 %v279
      %v452 = vpop.f32.mrf.mxu0
      %v453 = vadd.f32 0.0, %v452
      %v454 = vpop.f32.mrf.mxu0
      %455 = vmatprep.mubr.f32.mxu0 0.0
      %456 = vmatmul.mubr.f32.gmra.mxu0 %v282
      %v457 = vpop.f32.mrf.mxu0
      %v458 = vadd.f32 0.0, %v457
      %v459 = vpop.f32.mrf.mxu0
      %460 = vmatprep.mubr.f32.mxu0 0.0
      %461 = vmatmul.mubr.f32.gmra.mxu0 %v285
      %v462 = vpop.f32.mrf.mxu0
      %v463 = vadd.f32 0.0, %v462
      %v464 = vpop.f32.mrf.mxu0
      %465 = vmatprep.mubr.f32.mxu0 0.0
      %466 = vmatmul.mubr.f32.gmra.mxu0 %v288
      %v467 = vpop.f32.mrf.mxu0
      %v468 = vadd.f32 0.0, %v467
      %v469 = vpop.f32.mrf.mxu0
      %470 = vmatprep.mubr.f32.mxu0 0.0
      %471 = vmatmul.mubr.f32.gmra.mxu0 %v291
      %v472 = vpop.f32.mrf.mxu0
      %v473 = vadd.f32 0.0, %v472
      %v474 = vpop.f32.mrf.mxu0
      %475 = vmatprep.mubr.f32.mxu0 0.0
      %476 = vmatmul.mubr.f32.gmra.mxu0 %v294
      %v477 = vpop.f32.mrf.mxu0
      %v478 = vadd.f32 0.0, %v477
      %v479 = vpop.f32.mrf.mxu0
      %480 = vmatprep.mubr.f32.mxu0 0.0
      %481 = vmatmul.mubr.f32.gmra.mxu0 %v297
      %v482 = vpop.f32.mrf.mxu0
      %v483 = vadd.f32 0.0, %v482
      %v484 = vpop.f32.mrf.mxu0
      %485 = vmatprep.mubr.f32.mxu0 0.0
      %486 = vmatmul.mubr.f32.gmra.mxu0 %v300
      %v487 = vpop.f32.mrf.mxu0
      %v488 = vadd.f32 0.0, %v487
      %v489 = vpop.f32.mrf.mxu0
      %490 = vmatprep.mubr.f32.mxu0 0.0
      %491 = vmatmul.mubr.f32.gmra.mxu0 %v303
      %v492 = vpop.f32.mrf.mxu0
      %v493 = vadd.f32 0.0, %v492
      %v494 = vpop.f32.mrf.mxu0
      %495 = vmatprep.mubr.f32.mxu0 0.0
      %496 = vmatmul.mubr.f32.gmra.mxu0 %v306
      %v497 = vpop.f32.mrf.mxu0
      %v498 = vadd.f32 0.0, %v497
      %v499 = vpop.f32.mrf.mxu0
      %500 = vmatprep.mubr.f32.mxu0 0.0
      %501 = vmatmul.mubr.f32.gmra.mxu0 %v309
      %v502 = vpop.f32.mrf.mxu0
      %v503 = vadd.f32 0.0, %v502
      %v504 = vpop.f32.mrf.mxu0
      %505 = vmatprep.mubr.f32.mxu0 0.0
      %506 = vmatmul.mubr.f32.gmra.mxu0 %v312
      %v507 = vpop.f32.mrf.mxu0
      %v508 = vadd.f32 0.0, %v507
      %v509 = vpop.f32.mrf.mxu0
      %510 = vmatprep.mubr.f32.mxu0 0.0
      %511 = vmatmul.mubr.f32.gmra.mxu0 %v315
      %v512 = vpop.f32.mrf.mxu0
      %v513 = vadd.f32 0.0, %v512
      %v514 = vpop.f32.mrf.mxu0
      %515 = vmatprep.mubr.f32.mxu0 0.0
      %516 = vmatmul.mubr.f32.gmra.mxu0 %v318
      %v517 = vpop.f32.mrf.mxu0
      %v518 = vadd.f32 0.0, %v517
      %v519 = vpop.f32.mrf.mxu0
      %520 = vmatprep.mubr.f32.mxu0 0.0
      %521 = vmatmul.mubr.f32.gmra.mxu0 %v321
      %v522 = vpop.f32.mrf.mxu0
      %v523 = vadd.f32 0.0, %v522
      %v524 = vpop.f32.mrf.mxu0
      %525 = vmatprep.mubr.f32.mxu0 0.0
      %526 = vmatmul.mubr.f32.gmra.mxu0 %v324
      %v527 = vpop.f32.mrf.mxu0
      %v528 = vadd.f32 0.0, %v527
      %v529 = vpop.f32.mrf.mxu0
      %530 = vmatprep.mubr.f32.mxu0 0.0
      %531 = vmatmul.mubr.f32.gmra.mxu0 %v327
      %v532 = vpop.f32.mrf.mxu0
      %v533 = vadd.f32 0.0, %v532
      %v534 = vpop.f32.mrf.mxu0
      %535 = vmatprep.mubr.f32.mxu0 0.0
      %536 = vmatmul.mubr.f32.gmra.mxu0 %v330
      %v537 = vpop.f32.mrf.mxu0
      %v538 = vadd.f32 0.0, %v537
      %v539 = vpop.f32.mrf.mxu0
      %540 = vmatprep.mubr.f32.mxu0 0.0
      %541 = vmatmul.mubr.f32.gmra.mxu0 %v333
      %v542 = vpop.f32.mrf.mxu0
      %v543 = vadd.f32 0.0, %v542
      %v544 = vpop.f32.mrf.mxu0
      %545 = vmatprep.mubr.f32.mxu0 0.0
      %546 = vmatmul.mubr.f32.gmra.mxu0 %v336
      %v547 = vpop.f32.mrf.mxu0
      %v548 = vadd.f32 0.0, %v547
      %v549 = vpop.f32.mrf.mxu0
      %550 = vmatprep.mubr.f32.mxu0 0.0
      %551 = vmatmul.mubr.f32.gmra.mxu0 %v339
      %v552 = vpop.f32.mrf.mxu0
      %v553 = vadd.f32 0.0, %v552
      %v554 = vpop.f32.mrf.mxu0
      %555 = vmatprep.mubr.f32.mxu0 0.0
      %556 = vmatmul.mubr.f32.gmra.mxu0 %v342
      %v557 = vpop.f32.mrf.mxu0
      %v558 = vadd.f32 0.0, %v557
      %v559 = vpop.f32.mrf.mxu0
      %560 = vmatprep.mubr.f32.mxu0 0.0
      %561 = vmatmul.mubr.f32.gmra.mxu0 %v345
      %v562 = vpop.f32.mrf.mxu0
      %v563 = vadd.f32 0.0, %v562
      %v564 = vpop.f32.mrf.mxu0
      %565 = vmatprep.mubr.f32.mxu0 0.0
      %566 = vmatmul.mubr.f32.gmra.mxu0 %v348
      %v567 = vpop.f32.mrf.mxu0
      %v568 = vadd.f32 0.0, %v567
      %v569 = vpop.f32.mrf.mxu0
      %570 = vmatprep.mubr.f32.mxu0 0.0
      %571 = vmatmul.mubr.f32.gmra.mxu0 %v351
      %v572 = vpop.f32.mrf.mxu0
      %v573 = vadd.f32 0.0, %v572
      %v574 = vpop.f32.mrf.mxu0
      %575 = vmatprep.mubr.f32.mxu0 0.0
      %576 = vmatmul.mubr.f32.gmra.mxu0 %v354
      %v577 = vpop.f32.mrf.mxu0
      %v578 = vadd.f32 0.0, %v577
      %v579 = vpop.f32.mrf.mxu0
      %580 = vmatprep.mubr.f32.mxu0 0.0
      %581 = vmatmul.mubr.f32.gmra.mxu0 %v357
      %v582 = vpop.f32.mrf.mxu0
      %v583 = vadd.f32 0.0, %v582
      %v584 = vpop.f32.mrf.mxu0
      %585 = vmatprep.mubr.f32.mxu0 0.0
      %586 = vmatmul.mubr.f32.gmra.mxu0 %v360
      %v587 = vpop.f32.mrf.mxu0
      %v588 = vadd.f32 0.0, %v587
      %v589 = vpop.f32.mrf.mxu0
      %590 = vmatprep.mubr.f32.mxu0 0.0
      %591 = vmatmul.mubr.f32.gmra.mxu0 %v363
      %v592 = vpop.f32.mrf.mxu0
      %v593 = vadd.f32 0.0, %v592
      %v594 = vpop.f32.mrf.mxu0
      %595 = vmatprep.mubr.f32.mxu0 0.0
      %596 = vmatmul.mubr.f32.gmra.mxu0 %v366
      %v597 = vpop.f32.mrf.mxu0
      %v598 = vadd.f32 0.0, %v597
      %v599 = vpop.f32.mrf.mxu0
      %600 = vdwg.mxu0
      %v601 = vld [vmem:[%s209] sm:$0xff]
      %v602 = vld [vmem:[%s209 + $0x8] sm:$0xff]
      %v603 = vld [vmem:[%s209 + $0x10] sm:$0xff]
      %v604 = vld [vmem:[%s209 + $0x18] sm:$0xff]
      %v606 = vsel %vm271, %v601, 0
      %v609 = vsel %vm271, %v602, 0
      %v612 = vsel %vm271, %v603, 0
      %v615 = vsel %vm271, %v604, 0
      %v617 = vsel %vm271, %v255, 0
      %v619 = vsel %vm271, %v256, 0
      %v621 = vsel %vm271, %v257, 0
      %v623 = vsel %vm271, %v258, 0
      %625 = vmatprep.subr.mxu0 0.0
      %626 = vmatpush1.xpose.msra.mxu0 0.0
      %627 = vmatprep.subr.mxu0 0.0
      %628 = vmatpush1.xpose.msra.mxu0 0.0
      %629 = vmatprep.subr.mxu0 0.0
      %630 = vmatpush1.xpose.msra.mxu0 0.0
      %631 = vmatprep.subr.mxu0 0.0
      %632 = vmatpush1.xpose.msra.mxu0 0.0
      %633 = vmatprep.subr.mxu0 0.0
      %634 = vmatpush1.xpose.msra.mxu0 0.0
      %635 = vmatprep.subr.mxu0 0.0
      %636 = vmatpush1.xpose.msra.mxu0 0.0
      %637 = vmatprep.subr.mxu0 0.0
      %638 = vmatpush1.xpose.msra.mxu0 0.0
      %639 = vmatprep.subr.mxu0 0.0
      %640 = vmatpush1.xpose.msra.mxu0 0.0
      %641 = vmatprep.subr.mxu0 0.0
      %642 = vmatpush1.xpose.msra.mxu0 0.0
      %643 = vmatprep.subr.mxu0 0.0
      %644 = vmatpush1.xpose.msra.mxu0 0.0
      %645 = vmatprep.subr.mxu0 0.0
      %646 = vmatpush1.xpose.msra.mxu0 0.0
      %647 = vmatprep.subr.mxu0 0.0
      %648 = vmatpush1.xpose.msra.mxu0 0.0
      %649 = vmatprep.subr.mxu0 0.0
      %650 = vmatpush1.xpose.msra.mxu0 %v623
      %651 = vmatprep.subr.mxu0 0.0
      %652 = vmatpush1.xpose.msra.mxu0 %v621
      %653 = vmatprep.subr.mxu0 0.0
      %654 = vmatpush1.xpose.msra.mxu0 %v619
      %655 = vmatprep.subr.mxu0 0.0
      %656 = vmatpush1.xpose.msra.mxu0 %v617
      %657 = vmatprep.subr.mxu0 0.0
      %658 = vmatpush2.xpose.msra.mxu0 0.0
      %659 = vmatprep.subr.mxu0 0.0
      %660 = vmatpush2.xpose.msra.mxu0 0.0
      %661 = vmatprep.subr.mxu0 0.0
      %662 = vmatpush2.xpose.msra.mxu0 0.0
      %663 = vmatprep.subr.mxu0 0.0
      %664 = vmatpush2.xpose.msra.mxu0 0.0
      %665 = vmatprep.subr.mxu0 0.0
      %666 = vmatpush2.xpose.msra.mxu0 0.0
      %667 = vmatprep.subr.mxu0 0.0
      %668 = vmatpush2.xpose.msra.mxu0 0.0
      %669 = vmatprep.subr.mxu0 0.0
      %670 = vmatpush2.xpose.msra.mxu0 0.0
      %671 = vmatprep.subr.mxu0 0.0
      %672 = vmatpush2.xpose.msra.mxu0 0.0
      %673 = vmatprep.subr.mxu0 0.0
      %674 = vmatpush2.xpose.msra.mxu0 0.0
      %675 = vmatprep.subr.mxu0 0.0
      %676 = vmatpush2.xpose.msra.mxu0 0.0
      %677 = vmatprep.subr.mxu0 0.0
      %678 = vmatpush2.xpose.msra.mxu0 0.0
      %679 = vmatprep.subr.mxu0 0.0
      %680 = vmatpush2.xpose.msra.mxu0 0.0
      %681 = vmatprep.subr.mxu0 0.0
      %682 = vmatpush2.xpose.msra.mxu0 0.0
      %683 = vmatprep.subr.mxu0 0.0
      %684 = vmatpush2.xpose.msra.mxu0 0.0
      %685 = vmatprep.subr.mxu0 0.0
      %686 = vmatpush2.xpose.msra.mxu0 0.0
      %687 = vmatprep.subr.mxu0 0.0
      %688 = vmatpush2.xpose.msra.mxu0 0.0
      %689 = vmatprep.mubr.f32.mxu0 0.0
      %690 = vmatmul.mubr.f32.gmra.mxu0 %v606
      %v691 = vpop.f32.mrf.mxu0
      %v692 = vadd.f32 0.0, %v691
      %v693 = vpop.f32.mrf.mxu0
      %694 = vmatprep.mubr.f32.mxu0 0.0
      %695 = vmatmul.mubr.f32.gmra.mxu0 %v609
      %v696 = vpop.f32.mrf.mxu0
      %v697 = vadd.f32 0.0, %v696
      %v698 = vpop.f32.mrf.mxu0
      %699 = vmatprep.mubr.f32.mxu0 0.0
      %700 = vmatmul.mubr.f32.gmra.mxu0 %v612
      %v701 = vpop.f32.mrf.mxu0
      %v702 = vadd.f32 0.0, %v701
      %v703 = vpop.f32.mrf.mxu0
      %704 = vmatprep.mubr.f32.mxu0 0.0
      %705 = vmatmul.mubr.f32.gmra.mxu0 %v615
      %v706 = vpop.f32.mrf.mxu0
      %v707 = vadd.f32 0.0, %v706
      %v708 = vpop.f32.mrf.mxu0
      %709 = vdwg.mxu0
      %v714 = vcombine.high %v692, %v692
      %v716 = vunpack.c.l.s4 1966171168
      %v717 = vunpack.c.0.s8 %v716
      %v718 = vlaneseq
      %v719 = vshrl.u32 %v718, 7
      %v720 = vsub.s32 %v717, %v719
      %v721 = vrot.slane %v692, %v720
      %v723 = vunpack.c.l.s4 1966171168
      %v724 = vunpack.c.0.s8 %v723
      %v725 = vlaneseq
      %v726 = vshrl.u32 %v725, 7
      %v727 = vsub.s32 %v724, %v726
      %v728 = vrot.slane %v714, %v727
      %v729 = vcombine.high %v721, %v721
      %v730 = vcombine.high %v728, %v728
      %v732 = vunpack.c.l.s4 1966171168
      %v733 = vunpack.c.0.s8 %v732
      %v734 = vlaneseq
      %v735 = vshrl.u32 %v734, 7
      %v736 = vsub.s32 %v733, %v735
      %v737 = vrot.slane %v721, %v736
      %v739 = vunpack.c.l.s4 1966171168
      %v740 = vunpack.c.0.s8 %v739
      %v741 = vlaneseq
      %v742 = vshrl.u32 %v741, 7
      %v743 = vsub.s32 %v740, %v742
      %v744 = vrot.slane %v728, %v743
      %v746 = vunpack.c.l.s4 1966171168
      %v747 = vunpack.c.0.s8 %v746
      %v748 = vlaneseq
      %v749 = vshrl.u32 %v748, 7
      %v750 = vsub.s32 %v747, %v749
      %v751 = vrot.slane %v729, %v750
      %v753 = vunpack.c.l.s4 1966171168
      %v754 = vunpack.c.0.s8 %v753
      %v755 = vlaneseq
      %v756 = vshrl.u32 %v755, 7
      %v757 = vsub.s32 %v754, %v756
      %v758 = vrot.slane %v730, %v757
      %v759 = vcombine.high %v737, %v737
      %v760 = vcombine.high %v744, %v744
      %v761 = vcombine.high %v751, %v751
      %v762 = vcombine.high %v758, %v758
      %v763 = vcombine.high %v697, %v697
      %v765 = vunpack.c.l.s4 1966171168
      %v766 = vunpack.c.0.s8 %v765
      %v767 = vlaneseq
      %v768 = vshrl.u32 %v767, 7
      %v769 = vsub.s32 %v766, %v768
      %v770 = vrot.slane %v697, %v769
      %v772 = vunpack.c.l.s4 1966171168
      %v773 = vunpack.c.0.s8 %v772
      %v774 = vlaneseq
      %v775 = vshrl.u32 %v774, 7
      %v776 = vsub.s32 %v773, %v775
      %v777 = vrot.slane %v763, %v776
      %v778 = vcombine.high %v770, %v770
      %v779 = vcombine.high %v777, %v777
      %v781 = vunpack.c.l.s4 1966171168
      %v782 = vunpack.c.0.s8 %v781
      %v783 = vlaneseq
      %v784 = vshrl.u32 %v783, 7
      %v785 = vsub.s32 %v782, %v784
      %v786 = vrot.slane %v770, %v785
      %v788 = vunpack.c.l.s4 1966171168
      %v789 = vunpack.c.0.s8 %v788
      %v790 = vlaneseq
      %v791 = vshrl.u32 %v790, 7
      %v792 = vsub.s32 %v789, %v791
      %v793 = vrot.slane %v777, %v792
      %v795 = vunpack.c.l.s4 1966171168
      %v796 = vunpack.c.0.s8 %v795
      %v797 = vlaneseq
      %v798 = vshrl.u32 %v797, 7
      %v799 = vsub.s32 %v796, %v798
      %v800 = vrot.slane %v778, %v799
      %v802 = vunpack.c.l.s4 1966171168
      %v803 = vunpack.c.0.s8 %v802
      %v804 = vlaneseq
      %v805 = vshrl.u32 %v804, 7
      %v806 = vsub.s32 %v803, %v805
      %v807 = vrot.slane %v779, %v806
      %v808 = vcombine.high %v786, %v786
      %v809 = vcombine.high %v793, %v793
      %v810 = vcombine.high %v800, %v800
      %v811 = vcombine.high %v807, %v807
      %v812 = vcombine.high %v702, %v702
      %v814 = vunpack.c.l.s4 1966171168
      %v815 = vunpack.c.0.s8 %v814
      %v816 = vlaneseq
      %v817 = vshrl.u32 %v816, 7
      %v818 = vsub.s32 %v815, %v817
      %v819 = vrot.slane %v702, %v818
      %v821 = vunpack.c.l.s4 1966171168
      %v822 = vunpack.c.0.s8 %v821
      %v823 = vlaneseq
      %v824 = vshrl.u32 %v823, 7
      %v825 = vsub.s32 %v822, %v824
      %v826 = vrot.slane %v812, %v825
      %v827 = vcombine.high %v819, %v819
      %v828 = vcombine.high %v826, %v826
      %v830 = vunpack.c.l.s4 1966171168
      %v831 = vunpack.c.0.s8 %v830
      %v832 = vlaneseq
      %v833 = vshrl.u32 %v832, 7
      %v834 = vsub.s32 %v831, %v833
      %v835 = vrot.slane %v819, %v834
      %v837 = vunpack.c.l.s4 1966171168
      %v838 = vunpack.c.0.s8 %v837
      %v839 = vlaneseq
      %v840 = vshrl.u32 %v839, 7
      %v841 = vsub.s32 %v838, %v840
      %v842 = vrot.slane %v826, %v841
      %v844 = vunpack.c.l.s4 1966171168
      %v845 = vunpack.c.0.s8 %v844
      %v846 = vlaneseq
      %v847 = vshrl.u32 %v846, 7
      %v848 = vsub.s32 %v845, %v847
      %v849 = vrot.slane %v827, %v848
      %v851 = vunpack.c.l.s4 1966171168
      %v852 = vunpack.c.0.s8 %v851
      %v853 = vlaneseq
      %v854 = vshrl.u32 %v853, 7
      %v855 = vsub.s32 %v852, %v854
      %v856 = vrot.slane %v828, %v855
      %v857 = vcombine.high %v835, %v835
      %v858 = vcombine.high %v842, %v842
      %v859 = vcombine.high %v849, %v849
      %v860 = vcombine.high %v856, %v856
      %v861 = vcombine.high %v707, %v707
      %v863 = vunpack.c.l.s4 1966171168
      %v864 = vunpack.c.0.s8 %v863
      %v865 = vlaneseq
      %v866 = vshrl.u32 %v865, 7
      %v867 = vsub.s32 %v864, %v866
      %v868 = vrot.slane %v707, %v867
      %v870 = vunpack.c.l.s4 1966171168
      %v871 = vunpack.c.0.s8 %v870
      %v872 = vlaneseq
      %v873 = vshrl.u32 %v872, 7
      %v874 = vsub.s32 %v871, %v873
      %v875 = vrot.slane %v861, %v874
      %v876 = vcombine.high %v868, %v868
      %v877 = vcombine.high %v875, %v875
      %v879 = vunpack.c.l.s4 1966171168
      %v880 = vunpack.c.0.s8 %v879
      %v881 = vlaneseq
      %v882 = vshrl.u32 %v881, 7
      %v883 = vsub.s32 %v880, %v882
      %v884 = vrot.slane %v868, %v883
      %v886 = vunpack.c.l.s4 1966171168
      %v887 = vunpack.c.0.s8 %v886
      %v888 = vlaneseq
      %v889 = vshrl.u32 %v888, 7
      %v890 = vsub.s32 %v887, %v889
      %v891 = vrot.slane %v875, %v890
      %v893 = vunpack.c.l.s4 1966171168
      %v894 = vunpack.c.0.s8 %v893
      %v895 = vlaneseq
      %v896 = vshrl.u32 %v895, 7
      %v897 = vsub.s32 %v894, %v896
      %v898 = vrot.slane %v876, %v897
      %v900 = vunpack.c.l.s4 1966171168
      %v901 = vunpack.c.0.s8 %v900
      %v902 = vlaneseq
      %v903 = vshrl.u32 %v902, 7
      %v904 = vsub.s32 %v901, %v903
      %v905 = vrot.slane %v877, %v904
      %v906 = vcombine.high %v884, %v884
      %v907 = vcombine.high %v891, %v891
      %v908 = vcombine.high %v898, %v898
      %v909 = vcombine.high %v905, %v905
      %v910 = vlaneseq
      %v911 = vshrl.u32 %v910, 7
      %v912 = vsub.s32 0, %v911
      %v913 = vrot.slane %v737, %v912
      %v914 = vlaneseq
      %v915 = vshrl.u32 %v914, 7
      %v916 = vsub.s32 0, %v915
      %v917 = vrot.slane %v751, %v916
      %v918 = vlaneseq
      %v919 = vshrl.u32 %v918, 7
      %v920 = vsub.s32 0, %v919
      %v921 = vrot.slane %v759, %v920
      %v922 = vlaneseq
      %v923 = vshrl.u32 %v922, 7
      %v924 = vsub.s32 0, %v923
      %v925 = vrot.slane %v761, %v924
      %v926 = vlaneseq
      %v927 = vshrl.u32 %v926, 7
      %v928 = vsub.s32 0, %v927
      %v929 = vrot.slane %v744, %v928
      %v930 = vlaneseq
      %v931 = vshrl.u32 %v930, 7
      %v932 = vsub.s32 0, %v931
      %v933 = vrot.slane %v758, %v932
      %v934 = vlaneseq
      %v935 = vshrl.u32 %v934, 7
      %v936 = vsub.s32 0, %v935
      %v937 = vrot.slane %v760, %v936
      %v938 = vlaneseq
      %v939 = vshrl.u32 %v938, 7
      %v940 = vsub.s32 0, %v939
      %v941 = vrot.slane %v762, %v940
      %v942 = vlaneseq
      %v943 = vshrl.u32 %v942, 7
      %v944 = vsub.s32 0, %v943
      %v945 = vrot.slane %v786, %v944
      %v946 = vlaneseq
      %v947 = vshrl.u32 %v946, 7
      %v948 = vsub.s32 0, %v947
      %v949 = vrot.slane %v800, %v948
      %v950 = vlaneseq
      %v951 = vshrl.u32 %v950, 7
      %v952 = vsub.s32 0, %v951
      %v953 = vrot.slane %v808, %v952
      %v954 = vlaneseq
      %v955 = vshrl.u32 %v954, 7
      %v956 = vsub.s32 0, %v955
      %v957 = vrot.slane %v810, %v956
      %v958 = vlaneseq
      %v959 = vshrl.u32 %v958, 7
      %v960 = vsub.s32 0, %v959
      %v961 = vrot.slane %v793, %v960
      %v962 = vlaneseq
      %v963 = vshrl.u32 %v962, 7
      %v964 = vsub.s32 0, %v963
      %v965 = vrot.slane %v807, %v964
      %v966 = vlaneseq
      %v967 = vshrl.u32 %v966, 7
      %v968 = vsub.s32 0, %v967
      %v969 = vrot.slane %v809, %v968
      %v970 = vlaneseq
      %v971 = vshrl.u32 %v970, 7
      %v972 = vsub.s32 0, %v971
      %v973 = vrot.slane %v811, %v972
      %v974 = vlaneseq
      %v975 = vshrl.u32 %v974, 7
      %v976 = vsub.s32 0, %v975
      %v977 = vrot.slane %v835, %v976
      %v978 = vlaneseq
      %v979 = vshrl.u32 %v978, 7
      %v980 = vsub.s32 0, %v979
      %v981 = vrot.slane %v849, %v980
      %v982 = vlaneseq
      %v983 = vshrl.u32 %v982, 7
      %v984 = vsub.s32 0, %v983
      %v985 = vrot.slane %v857, %v984
      %v986 = vlaneseq
      %v987 = vshrl.u32 %v986, 7
      %v988 = vsub.s32 0, %v987
      %v989 = vrot.slane %v859, %v988
      %v990 = vlaneseq
      %v991 = vshrl.u32 %v990, 7
      %v992 = vsub.s32 0, %v991
      %v993 = vrot.slane %v842, %v992
      %v994 = vlaneseq
      %v995 = vshrl.u32 %v994, 7
      %v996 = vsub.s32 0, %v995
      %v997 = vrot.slane %v856, %v996
      %v998 = vlaneseq
      %v999 = vshrl.u32 %v998, 7
      %v1000 = vsub.s32 0, %v999
      %v1001 = vrot.slane %v858, %v1000
      %v1002 = vlaneseq
      %v1003 = vshrl.u32 %v1002, 7
      %v1004 = vsub.s32 0, %v1003
      %v1005 = vrot.slane %v860, %v1004
      %v1006 = vlaneseq
      %v1007 = vshrl.u32 %v1006, 7
      %v1008 = vsub.s32 0, %v1007
      %v1009 = vrot.slane %v884, %v1008
      %v1010 = vlaneseq
      %v1011 = vshrl.u32 %v1010, 7
      %v1012 = vsub.s32 0, %v1011
      %v1013 = vrot.slane %v898, %v1012
      %v1014 = vlaneseq
      %v1015 = vshrl.u32 %v1014, 7
      %v1016 = vsub.s32 0, %v1015
      %v1017 = vrot.slane %v906, %v1016
      %v1018 = vlaneseq
      %v1019 = vshrl.u32 %v1018, 7
      %v1020 = vsub.s32 0, %v1019
      %v1021 = vrot.slane %v908, %v1020
      %v1022 = vlaneseq
      %v1023 = vshrl.u32 %v1022, 7
      %v1024 = vsub.s32 0, %v1023
      %v1025 = vrot.slane %v891, %v1024
      %v1026 = vlaneseq
      %v1027 = vshrl.u32 %v1026, 7
      %v1028 = vsub.s32 0, %v1027
      %v1029 = vrot.slane %v905, %v1028
      %v1030 = vlaneseq
      %v1031 = vshrl.u32 %v1030, 7
      %v1032 = vsub.s32 0, %v1031
      %v1033 = vrot.slane %v907, %v1032
      %v1034 = vlaneseq
      %v1035 = vshrl.u32 %v1034, 7
      %v1036 = vsub.s32 0, %v1035
      %v1037 = vrot.slane %v909, %v1036
      %v1070 = vadd.f32 %v443, %v913
      %v1071 = vadd.f32 %v448, %v917
      %v1072 = vadd.f32 %v453, %v921
      %v1073 = vadd.f32 %v458, %v925
      %v1074 = vadd.f32 %v463, %v929
      %v1075 = vadd.f32 %v468, %v933
      %v1076 = vadd.f32 %v473, %v937
      %v1077 = vadd.f32 %v478, %v941
      %v1078 = vadd.f32 %v483, %v945
      %v1079 = vadd.f32 %v488, %v949
      %v1080 = vadd.f32 %v493, %v953
      %v1081 = vadd.f32 %v498, %v957
      %v1082 = vadd.f32 %v503, %v961
      %v1083 = vadd.f32 %v508, %v965
      %v1084 = vadd.f32 %v513, %v969
      %v1085 = vadd.f32 %v518, %v973
      %v1086 = vadd.f32 %v523, %v977
      %v1087 = vadd.f32 %v528, %v981
      %v1088 = vadd.f32 %v533, %v985
      %v1089 = vadd.f32 %v538, %v989
      %v1090 = vadd.f32 %v543, %v993
      %v1091 = vadd.f32 %v548, %v997
      %v1092 = vadd.f32 %v553, %v1001
      %v1093 = vadd.f32 %v558, %v1005
      %v1094 = vadd.f32 %v563, %v1009
      %v1095 = vadd.f32 %v568, %v1013
      %v1096 = vadd.f32 %v573, %v1017
      %v1097 = vadd.f32 %v578, %v1021
      %v1098 = vadd.f32 %v583, %v1025
      %v1099 = vadd.f32 %v588, %v1029
      %v1100 = vadd.f32 %v593, %v1033
      %v1101 = vadd.f32 %v598, %v1037
      %v1102 = vtanh.pop %v1070
      %v1103 = vtanh.pop %v1071
      %v1104 = vtanh.pop %v1072
      %v1105 = vtanh.pop %v1073
      %v1106 = vtanh.pop %v1074
      %v1107 = vtanh.pop %v1075
      %v1108 = vtanh.pop %v1076
      %v1109 = vtanh.pop %v1077
      %v1110 = vtanh.pop %v1078
      %v1111 = vtanh.pop %v1079
      %v1112 = vtanh.pop %v1080
      %v1113 = vtanh.pop %v1081
      %v1114 = vtanh.pop %v1082
      %v1115 = vtanh.pop %v1083
      %v1116 = vtanh.pop %v1084
      %v1117 = vtanh.pop %v1085
      %v1118 = vtanh.pop %v1086
      %v1119 = vtanh.pop %v1087
      %v1120 = vtanh.pop %v1088
      %v1121 = vtanh.pop %v1089
      %v1122 = vtanh.pop %v1090
      %v1123 = vtanh.pop %v1091
      %v1124 = vtanh.pop %v1092
      %v1125 = vtanh.pop %v1093
      %v1126 = vtanh.pop %v1094
      %v1127 = vtanh.pop %v1095
      %v1128 = vtanh.pop %v1096
      %v1129 = vtanh.pop %v1097
      %v1130 = vtanh.pop %v1098
      %v1131 = vtanh.pop %v1099
      %v1132 = vtanh.pop %v1100
      %v1133 = vtanh.pop %v1101
      %v1134 = vld [vmem:[%s3] sm:$0x1]
      %v1136 = vlaneseq
      %v1137 = vshrl.u32 %v1136, 7
      %v1138 = vsub.s32 0, %v1137
      %v1139 = vrot.slane %v1134, %v1138
      %v1141 = vmul.f32 %v1102, %v1139
      %v1142 = vmul.f32 %v1103, %v1139
      %v1143 = vmul.f32 %v1104, %v1139
      %v1144 = vmul.f32 %v1105, %v1139
      %v1145 = vmul.f32 %v1106, %v1139
      %v1146 = vmul.f32 %v1107, %v1139
      %v1147 = vmul.f32 %v1108, %v1139
      %v1148 = vmul.f32 %v1109, %v1139
      %v1149 = vmul.f32 %v1110, %v1139
      %v1150 = vmul.f32 %v1111, %v1139
      %v1151 = vmul.f32 %v1112, %v1139
      %v1152 = vmul.f32 %v1113, %v1139
      %v1153 = vmul.f32 %v1114, %v1139
      %v1154 = vmul.f32 %v1115, %v1139
      %v1155 = vmul.f32 %v1116, %v1139
      %v1156 = vmul.f32 %v1117, %v1139
      %v1157 = vmul.f32 %v1118, %v1139
      %v1158 = vmul.f32 %v1119, %v1139
      %v1159 = vmul.f32 %v1120, %v1139
      %v1160 = vmul.f32 %v1121, %v1139
      %v1161 = vmul.f32 %v1122, %v1139
      %v1162 = vmul.f32 %v1123, %v1139
      %v1163 = vmul.f32 %v1124, %v1139
      %v1164 = vmul.f32 %v1125, %v1139
      %v1165 = vmul.f32 %v1126, %v1139
      %v1166 = vmul.f32 %v1127, %v1139
      %v1167 = vmul.f32 %v1128, %v1139
      %v1168 = vmul.f32 %v1129, %v1139
      %v1169 = vmul.f32 %v1130, %v1139
      %v1170 = vmul.f32 %v1131, %v1139
      %v1171 = vmul.f32 %v1132, %v1139
      %v1172 = vmul.f32 %v1133, %v1139
      %v1173 = vsel %vm271, %v1141, 0.0
      %1174 = vadd.xlane.f32.xlu0 %v1173
      %v1175 = vpop.xlane.xlu0 %1174
      %v1176 = vsel %vm271, %v1142, 0.0
      %1177 = vadd.xlane.f32.xlu0 %v1176
      %v1178 = vpop.xlane.xlu0 %1177
      %v1179 = vsel %vm271, %v1143, 0.0
      %1180 = vadd.xlane.f32.xlu0 %v1179
      %v1181 = vpop.xlane.xlu0 %1180
      %v1182 = vsel %vm271, %v1144, 0.0
      %1183 = vadd.xlane.f32.xlu0 %v1182
      %v1184 = vpop.xlane.xlu0 %1183
      %v1185 = vsel %vm271, %v1145, 0.0
      %1186 = vadd.xlane.f32.xlu0 %v1185
      %v1187 = vpop.xlane.xlu0 %1186
      %v1188 = vsel %vm271, %v1146, 0.0
      %1189 = vadd.xlane.f32.xlu0 %v1188
      %v1190 = vpop.xlane.xlu0 %1189
      %v1191 = vsel %vm271, %v1147, 0.0
      %1192 = vadd.xlane.f32.xlu0 %v1191
      %v1193 = vpop.xlane.xlu0 %1192
      %v1194 = vsel %vm271, %v1148, 0.0
      %1195 = vadd.xlane.f32.xlu0 %v1194
      %v1196 = vpop.xlane.xlu0 %1195
      %v1197 = vsel %vm271, %v1149, 0.0
      %1198 = vadd.xlane.f32.xlu0 %v1197
      %v1199 = vpop.xlane.xlu0 %1198
      %v1200 = vsel %vm271, %v1150, 0.0
      %1201 = vadd.xlane.f32.xlu0 %v1200
      %v1202 = vpop.xlane.xlu0 %1201
      %v1203 = vsel %vm271, %v1151, 0.0
      %1204 = vadd.xlane.f32.xlu0 %v1203
      %v1205 = vpop.xlane.xlu0 %1204
      %v1206 = vsel %vm271, %v1152, 0.0
      %1207 = vadd.xlane.f32.xlu0 %v1206
      %v1208 = vpop.xlane.xlu0 %1207
      %v1209 = vsel %vm271, %v1153, 0.0
      %1210 = vadd.xlane.f32.xlu0 %v1209
      %v1211 = vpop.xlane.xlu0 %1210
      %v1212 = vsel %vm271, %v1154, 0.0
      %1213 = vadd.xlane.f32.xlu0 %v1212
      %v1214 = vpop.xlane.xlu0 %1213
      %v1215 = vsel %vm271, %v1155, 0.0
      %1216 = vadd.xlane.f32.xlu0 %v1215
      %v1217 = vpop.xlane.xlu0 %1216
      %v1218 = vsel %vm271, %v1156, 0.0
      %1219 = vadd.xlane.f32.xlu0 %v1218
      %v1220 = vpop.xlane.xlu0 %1219
      %v1221 = vsel %vm271, %v1157, 0.0
      %1222 = vadd.xlane.f32.xlu0 %v1221
      %v1223 = vpop.xlane.xlu0 %1222
      %v1224 = vsel %vm271, %v1158, 0.0
      %1225 = vadd.xlane.f32.xlu0 %v1224
      %v1226 = vpop.xlane.xlu0 %1225
      %v1227 = vsel %vm271, %v1159, 0.0
      %1228 = vadd.xlane.f32.xlu0 %v1227
      %v1229 = vpop.xlane.xlu0 %1228
      %v1230 = vsel %vm271, %v1160, 0.0
      %1231 = vadd.xlane.f32.xlu0 %v1230
      %v1232 = vpop.xlane.xlu0 %1231
      %v1233 = vsel %vm271, %v1161, 0.0
      %1234 = vadd.xlane.f32.xlu0 %v1233
      %v1235 = vpop.xlane.xlu0 %1234
      %v1236 = vsel %vm271, %v1162, 0.0
      %1237 = vadd.xlane.f32.xlu0 %v1236
      %v1238 = vpop.xlane.xlu0 %1237
      %v1239 = vsel %vm271, %v1163, 0.0
      %1240 = vadd.xlane.f32.xlu0 %v1239
      %v1241 = vpop.xlane.xlu0 %1240
      %v1242 = vsel %vm271, %v1164, 0.0
      %1243 = vadd.xlane.f32.xlu0 %v1242
      %v1244 = vpop.xlane.xlu0 %1243
      %v1245 = vsel %vm271, %v1165, 0.0
      %1246 = vadd.xlane.f32.xlu0 %v1245
      %v1247 = vpop.xlane.xlu0 %1246
      %v1248 = vsel %vm271, %v1166, 0.0
      %1249 = vadd.xlane.f32.xlu0 %v1248
      %v1250 = vpop.xlane.xlu0 %1249
      %v1251 = vsel %vm271, %v1167, 0.0
      %1252 = vadd.xlane.f32.xlu0 %v1251
      %v1253 = vpop.xlane.xlu0 %1252
      %v1254 = vsel %vm271, %v1168, 0.0
      %1255 = vadd.xlane.f32.xlu0 %v1254
      %v1256 = vpop.xlane.xlu0 %1255
      %v1257 = vsel %vm271, %v1169, 0.0
      %1258 = vadd.xlane.f32.xlu0 %v1257
      %v1259 = vpop.xlane.xlu0 %1258
      %v1260 = vsel %vm271, %v1170, 0.0
      %1261 = vadd.xlane.f32.xlu0 %v1260
      %v1262 = vpop.xlane.xlu0 %1261
      %v1263 = vsel %vm271, %v1171, 0.0
      %1264 = vadd.xlane.f32.xlu0 %v1263
      %v1265 = vpop.xlane.xlu0 %1264
      %v1266 = vsel %vm271, %v1172, 0.0
      %1267 = vadd.xlane.f32.xlu0 %v1266
      %v1268 = vpop.xlane.xlu0 %1267
      %v1269 = vrot.slane %v1175, 4
      %v1270 = vmax.f32 %v1175, %v1269
      %v1271 = vrot.slane %v1270, 2
      %v1272 = vmax.f32 %v1270, %v1271
      %v1273 = vrot.slane %v1272, 1
      %v1274 = vmax.f32 %v1272, %v1273
      %v1275 = vrot.slane %v1178, 4
      %v1276 = vmax.f32 %v1178, %v1275
      %v1277 = vrot.slane %v1276, 2
      %v1278 = vmax.f32 %v1276, %v1277
      %v1279 = vrot.slane %v1278, 1
      %v1280 = vmax.f32 %v1278, %v1279
      %v1281 = vrot.slane %v1181, 4
      %v1282 = vmax.f32 %v1181, %v1281
      %v1283 = vrot.slane %v1282, 2
      %v1284 = vmax.f32 %v1282, %v1283
      %v1285 = vrot.slane %v1284, 1
      %v1286 = vmax.f32 %v1284, %v1285
      %v1287 = vrot.slane %v1184, 4
      %v1288 = vmax.f32 %v1184, %v1287
      %v1289 = vrot.slane %v1288, 2
      %v1290 = vmax.f32 %v1288, %v1289
      %v1291 = vrot.slane %v1290, 1
      %v1292 = vmax.f32 %v1290, %v1291
      %v1293 = vrot.slane %v1187, 4
      %v1294 = vmax.f32 %v1187, %v1293
      %v1295 = vrot.slane %v1294, 2
      %v1296 = vmax.f32 %v1294, %v1295
      %v1297 = vrot.slane %v1296, 1
      %v1298 = vmax.f32 %v1296, %v1297
      %v1299 = vrot.slane %v1190, 4
      %v1300 = vmax.f32 %v1190, %v1299
      %v1301 = vrot.slane %v1300, 2
      %v1302 = vmax.f32 %v1300, %v1301
      %v1303 = vrot.slane %v1302, 1
      %v1304 = vmax.f32 %v1302, %v1303
      %v1305 = vrot.slane %v1193, 4
      %v1306 = vmax.f32 %v1193, %v1305
      %v1307 = vrot.slane %v1306, 2
      %v1308 = vmax.f32 %v1306, %v1307
      %v1309 = vrot.slane %v1308, 1
      %v1310 = vmax.f32 %v1308, %v1309
      %v1311 = vrot.slane %v1196, 4
      %v1312 = vmax.f32 %v1196, %v1311
      %v1313 = vrot.slane %v1312, 2
      %v1314 = vmax.f32 %v1312, %v1313
      %v1315 = vrot.slane %v1314, 1
      %v1316 = vmax.f32 %v1314, %v1315
      %v1317 = vrot.slane %v1199, 4
      %v1318 = vmax.f32 %v1199, %v1317
      %v1319 = vrot.slane %v1318, 2
      %v1320 = vmax.f32 %v1318, %v1319
      %v1321 = vrot.slane %v1320, 1
      %v1322 = vmax.f32 %v1320, %v1321
      %v1323 = vrot.slane %v1202, 4
      %v1324 = vmax.f32 %v1202, %v1323
      %v1325 = vrot.slane %v1324, 2
      %v1326 = vmax.f32 %v1324, %v1325
      %v1327 = vrot.slane %v1326, 1
      %v1328 = vmax.f32 %v1326, %v1327
      %v1329 = vrot.slane %v1205, 4
      %v1330 = vmax.f32 %v1205, %v1329
      %v1331 = vrot.slane %v1330, 2
      %v1332 = vmax.f32 %v1330, %v1331
      %v1333 = vrot.slane %v1332, 1
      %v1334 = vmax.f32 %v1332, %v1333
      %v1335 = vrot.slane %v1208, 4
      %v1336 = vmax.f32 %v1208, %v1335
      %v1337 = vrot.slane %v1336, 2
      %v1338 = vmax.f32 %v1336, %v1337
      %v1339 = vrot.slane %v1338, 1
      %v1340 = vmax.f32 %v1338, %v1339
      %v1341 = vrot.slane %v1211, 4
      %v1342 = vmax.f32 %v1211, %v1341
      %v1343 = vrot.slane %v1342, 2
      %v1344 = vmax.f32 %v1342, %v1343
      %v1345 = vrot.slane %v1344, 1
      %v1346 = vmax.f32 %v1344, %v1345
      %v1347 = vrot.slane %v1214, 4
      %v1348 = vmax.f32 %v1214, %v1347
      %v1349 = vrot.slane %v1348, 2
      %v1350 = vmax.f32 %v1348, %v1349
      %v1351 = vrot.slane %v1350, 1
      %v1352 = vmax.f32 %v1350, %v1351
      %v1353 = vrot.slane %v1217, 4
      %v1354 = vmax.f32 %v1217, %v1353
      %v1355 = vrot.slane %v1354, 2
      %v1356 = vmax.f32 %v1354, %v1355
      %v1357 = vrot.slane %v1356, 1
      %v1358 = vmax.f32 %v1356, %v1357
      %v1359 = vrot.slane %v1220, 4
      %v1360 = vmax.f32 %v1220, %v1359
      %v1361 = vrot.slane %v1360, 2
      %v1362 = vmax.f32 %v1360, %v1361
      %v1363 = vrot.slane %v1362, 1
      %v1364 = vmax.f32 %v1362, %v1363
      %v1365 = vrot.slane %v1223, 4
      %v1366 = vmax.f32 %v1223, %v1365
      %v1367 = vrot.slane %v1366, 2
      %v1368 = vmax.f32 %v1366, %v1367
      %v1369 = vrot.slane %v1368, 1
      %v1370 = vmax.f32 %v1368, %v1369
      %v1371 = vrot.slane %v1226, 4
      %v1372 = vmax.f32 %v1226, %v1371
      %v1373 = vrot.slane %v1372, 2
      %v1374 = vmax.f32 %v1372, %v1373
      %v1375 = vrot.slane %v1374, 1
      %v1376 = vmax.f32 %v1374, %v1375
      %v1377 = vrot.slane %v1229, 4
      %v1378 = vmax.f32 %v1229, %v1377
      %v1379 = vrot.slane %v1378, 2
      %v1380 = vmax.f32 %v1378, %v1379
      %v1381 = vrot.slane %v1380, 1
      %v1382 = vmax.f32 %v1380, %v1381
      %v1383 = vrot.slane %v1232, 4
      %v1384 = vmax.f32 %v1232, %v1383
      %v1385 = vrot.slane %v1384, 2
      %v1386 = vmax.f32 %v1384, %v1385
      %v1387 = vrot.slane %v1386, 1
      %v1388 = vmax.f32 %v1386, %v1387
      %v1389 = vrot.slane %v1235, 4
      %v1390 = vmax.f32 %v1235, %v1389
      %v1391 = vrot.slane %v1390, 2
      %v1392 = vmax.f32 %v1390, %v1391
      %v1393 = vrot.slane %v1392, 1
      %v1394 = vmax.f32 %v1392, %v1393
      %v1395 = vrot.slane %v1238, 4
      %v1396 = vmax.f32 %v1238, %v1395
      %v1397 = vrot.slane %v1396, 2
      %v1398 = vmax.f32 %v1396, %v1397
      %v1399 = vrot.slane %v1398, 1
      %v1400 = vmax.f32 %v1398, %v1399
      %v1401 = vrot.slane %v1241, 4
      %v1402 = vmax.f32 %v1241, %v1401
      %v1403 = vrot.slane %v1402, 2
      %v1404 = vmax.f32 %v1402, %v1403
      %v1405 = vrot.slane %v1404, 1
      %v1406 = vmax.f32 %v1404, %v1405
      %v1407 = vrot.slane %v1244, 4
      %v1408 = vmax.f32 %v1244, %v1407
      %v1409 = vrot.slane %v1408, 2
      %v1410 = vmax.f32 %v1408, %v1409
      %v1411 = vrot.slane %v1410, 1
      %v1412 = vmax.f32 %v1410, %v1411
      %v1413 = vrot.slane %v1247, 4
      %v1414 = vmax.f32 %v1247, %v1413
      %v1415 = vrot.slane %v1414, 2
      %v1416 = vmax.f32 %v1414, %v1415
      %v1417 = vrot.slane %v1416, 1
      %v1418 = vmax.f32 %v1416, %v1417
      %v1419 = vrot.slane %v1250, 4
      %v1420 = vmax.f32 %v1250, %v1419
      %v1421 = vrot.slane %v1420, 2
      %v1422 = vmax.f32 %v1420, %v1421
      %v1423 = vrot.slane %v1422, 1
      %v1424 = vmax.f32 %v1422, %v1423
      %v1425 = vrot.slane %v1253, 4
      %v1426 = vmax.f32 %v1253, %v1425
      %v1427 = vrot.slane %v1426, 2
      %v1428 = vmax.f32 %v1426, %v1427
      %v1429 = vrot.slane %v1428, 1
      %v1430 = vmax.f32 %v1428, %v1429
      %v1431 = vrot.slane %v1256, 4
      %v1432 = vmax.f32 %v1256, %v1431
      %v1433 = vrot.slane %v1432, 2
      %v1434 = vmax.f32 %v1432, %v1433
      %v1435 = vrot.slane %v1434, 1
      %v1436 = vmax.f32 %v1434, %v1435
      %v1437 = vrot.slane %v1259, 4
      %v1438 = vmax.f32 %v1259, %v1437
      %v1439 = vrot.slane %v1438, 2
      %v1440 = vmax.f32 %v1438, %v1439
      %v1441 = vrot.slane %v1440, 1
      %v1442 = vmax.f32 %v1440, %v1441
      %v1443 = vrot.slane %v1262, 4
      %v1444 = vmax.f32 %v1262, %v1443
      %v1445 = vrot.slane %v1444, 2
      %v1446 = vmax.f32 %v1444, %v1445
      %v1447 = vrot.slane %v1446, 1
      %v1448 = vmax.f32 %v1446, %v1447
      %v1449 = vrot.slane %v1265, 4
      %v1450 = vmax.f32 %v1265, %v1449
      %v1451 = vrot.slane %v1450, 2
      %v1452 = vmax.f32 %v1450, %v1451
      %v1453 = vrot.slane %v1452, 1
      %v1454 = vmax.f32 %v1452, %v1453
      %v1455 = vrot.slane %v1268, 4
      %v1456 = vmax.f32 %v1268, %v1455
      %v1457 = vrot.slane %v1456, 2
      %v1458 = vmax.f32 %v1456, %v1457
      %v1459 = vrot.slane %v1458, 1
      %v1460 = vmax.f32 %v1458, %v1459
      %v1461 = vsub.f32 %v1175, %v1274
      %v1462 = vsub.f32 %v1178, %v1280
      %v1463 = vsub.f32 %v1181, %v1286
      %v1464 = vsub.f32 %v1184, %v1292
      %v1465 = vsub.f32 %v1187, %v1298
      %v1466 = vsub.f32 %v1190, %v1304
      %v1467 = vsub.f32 %v1193, %v1310
      %v1468 = vsub.f32 %v1196, %v1316
      %v1469 = vsub.f32 %v1199, %v1322
      %v1470 = vsub.f32 %v1202, %v1328
      %v1471 = vsub.f32 %v1205, %v1334
      %v1472 = vsub.f32 %v1208, %v1340
      %v1473 = vsub.f32 %v1211, %v1346
      %v1474 = vsub.f32 %v1214, %v1352
      %v1475 = vsub.f32 %v1217, %v1358
      %v1476 = vsub.f32 %v1220, %v1364
      %v1477 = vsub.f32 %v1223, %v1370
      %v1478 = vsub.f32 %v1226, %v1376
      %v1479 = vsub.f32 %v1229, %v1382
      %v1480 = vsub.f32 %v1232, %v1388
      %v1481 = vsub.f32 %v1235, %v1394
      %v1482 = vsub.f32 %v1238, %v1400
      %v1483 = vsub.f32 %v1241, %v1406
      %v1484 = vsub.f32 %v1244, %v1412
      %v1485 = vsub.f32 %v1247, %v1418
      %v1486 = vsub.f32 %v1250, %v1424
      %v1487 = vsub.f32 %v1253, %v1430
      %v1488 = vsub.f32 %v1256, %v1436
      %v1489 = vsub.f32 %v1259, %v1442
      %v1490 = vsub.f32 %v1262, %v1448
      %v1491 = vsub.f32 %v1265, %v1454
      %v1492 = vsub.f32 %v1268, %v1460
      %v1493 = vmul.f32 %v1461, 1.442695
      %v1494 = vpow.pop %v1493
      %v1495 = vmul.f32 %v1462, 1.442695
      %v1496 = vpow.pop %v1495
      %v1497 = vmul.f32 %v1463, 1.442695
      %v1498 = vpow.pop %v1497
      %v1499 = vmul.f32 %v1464, 1.442695
      %v1500 = vpow.pop %v1499
      %v1501 = vmul.f32 %v1465, 1.442695
      %v1502 = vpow.pop %v1501
      %v1503 = vmul.f32 %v1466, 1.442695
      %v1504 = vpow.pop %v1503
      %v1505 = vmul.f32 %v1467, 1.442695
      %v1506 = vpow.pop %v1505
      %v1507 = vmul.f32 %v1468, 1.442695
      %v1508 = vpow.pop %v1507
      %v1509 = vmul.f32 %v1469, 1.442695
      %v1510 = vpow.pop %v1509
      %v1511 = vmul.f32 %v1470, 1.442695
      %v1512 = vpow.pop %v1511
      %v1513 = vmul.f32 %v1471, 1.442695
      %v1514 = vpow.pop %v1513
      %v1515 = vmul.f32 %v1472, 1.442695
      %v1516 = vpow.pop %v1515
      %v1517 = vmul.f32 %v1473, 1.442695
      %v1518 = vpow.pop %v1517
      %v1519 = vmul.f32 %v1474, 1.442695
      %v1520 = vpow.pop %v1519
      %v1521 = vmul.f32 %v1475, 1.442695
      %v1522 = vpow.pop %v1521
      %v1523 = vmul.f32 %v1476, 1.442695
      %v1524 = vpow.pop %v1523
      %v1525 = vmul.f32 %v1477, 1.442695
      %v1526 = vpow.pop %v1525
      %v1527 = vmul.f32 %v1478, 1.442695
      %v1528 = vpow.pop %v1527
      %v1529 = vmul.f32 %v1479, 1.442695
      %v1530 = vpow.pop %v1529
      %v1531 = vmul.f32 %v1480, 1.442695
      %v1532 = vpow.pop %v1531
      %v1533 = vmul.f32 %v1481, 1.442695
      %v1534 = vpow.pop %v1533
      %v1535 = vmul.f32 %v1482, 1.442695
      %v1536 = vpow.pop %v1535
      %v1537 = vmul.f32 %v1483, 1.442695
      %v1538 = vpow.pop %v1537
      %v1539 = vmul.f32 %v1484, 1.442695
      %v1540 = vpow.pop %v1539
      %v1541 = vmul.f32 %v1485, 1.442695
      %v1542 = vpow.pop %v1541
      %v1543 = vmul.f32 %v1486, 1.442695
      %v1544 = vpow.pop %v1543
      %v1545 = vmul.f32 %v1487, 1.442695
      %v1546 = vpow.pop %v1545
      %v1547 = vmul.f32 %v1488, 1.442695
      %v1548 = vpow.pop %v1547
      %v1549 = vmul.f32 %v1489, 1.442695
      %v1550 = vpow.pop %v1549
      %v1551 = vmul.f32 %v1490, 1.442695
      %v1552 = vpow.pop %v1551
      %v1553 = vmul.f32 %v1491, 1.442695
      %v1554 = vpow.pop %v1553
      %v1555 = vmul.f32 %v1492, 1.442695
      %v1556 = vpow.pop %v1555
      %v1557 = vrot.slane %v1494, 4
      %v1558 = vadd.f32 %v1494, %v1557
      %v1559 = vrot.slane %v1558, 2
      %v1560 = vadd.f32 %v1558, %v1559
      %v1561 = vrot.slane %v1560, 1
      %v1562 = vadd.f32 %v1560, %v1561
      %v1563 = vrot.slane %v1496, 4
      %v1564 = vadd.f32 %v1496, %v1563
      %v1565 = vrot.slane %v1564, 2
      %v1566 = vadd.f32 %v1564, %v1565
      %v1567 = vrot.slane %v1566, 1
      %v1568 = vadd.f32 %v1566, %v1567
      %v1569 = vrot.slane %v1498, 4
      %v1570 = vadd.f32 %v1498, %v1569
      %v1571 = vrot.slane %v1570, 2
      %v1572 = vadd.f32 %v1570, %v1571
      %v1573 = vrot.slane %v1572, 1
      %v1574 = vadd.f32 %v1572, %v1573
      %v1575 = vrot.slane %v1500, 4
      %v1576 = vadd.f32 %v1500, %v1575
      %v1577 = vrot.slane %v1576, 2
      %v1578 = vadd.f32 %v1576, %v1577
      %v1579 = vrot.slane %v1578, 1
      %v1580 = vadd.f32 %v1578, %v1579
      %v1581 = vrot.slane %v1502, 4
      %v1582 = vadd.f32 %v1502, %v1581
      %v1583 = vrot.slane %v1582, 2
      %v1584 = vadd.f32 %v1582, %v1583
      %v1585 = vrot.slane %v1584, 1
      %v1586 = vadd.f32 %v1584, %v1585
      %v1587 = vrot.slane %v1504, 4
      %v1588 = vadd.f32 %v1504, %v1587
      %v1589 = vrot.slane %v1588, 2
      %v1590 = vadd.f32 %v1588, %v1589
      %v1591 = vrot.slane %v1590, 1
      %v1592 = vadd.f32 %v1590, %v1591
      %v1593 = vrot.slane %v1506, 4
      %v1594 = vadd.f32 %v1506, %v1593
      %v1595 = vrot.slane %v1594, 2
      %v1596 = vadd.f32 %v1594, %v1595
      %v1597 = vrot.slane %v1596, 1
      %v1598 = vadd.f32 %v1596, %v1597
      %v1599 = vrot.slane %v1508, 4
      %v1600 = vadd.f32 %v1508, %v1599
      %v1601 = vrot.slane %v1600, 2
      %v1602 = vadd.f32 %v1600, %v1601
      %v1603 = vrot.slane %v1602, 1
      %v1604 = vadd.f32 %v1602, %v1603
      %v1605 = vrot.slane %v1510, 4
      %v1606 = vadd.f32 %v1510, %v1605
      %v1607 = vrot.slane %v1606, 2
      %v1608 = vadd.f32 %v1606, %v1607
      %v1609 = vrot.slane %v1608, 1
      %v1610 = vadd.f32 %v1608, %v1609
      %v1611 = vrot.slane %v1512, 4
      %v1612 = vadd.f32 %v1512, %v1611
      %v1613 = vrot.slane %v1612, 2
      %v1614 = vadd.f32 %v1612, %v1613
      %v1615 = vrot.slane %v1614, 1
      %v1616 = vadd.f32 %v1614, %v1615
      %v1617 = vrot.slane %v1514, 4
      %v1618 = vadd.f32 %v1514, %v1617
      %v1619 = vrot.slane %v1618, 2
      %v1620 = vadd.f32 %v1618, %v1619
      %v1621 = vrot.slane %v1620, 1
      %v1622 = vadd.f32 %v1620, %v1621
      %v1623 = vrot.slane %v1516, 4
      %v1624 = vadd.f32 %v1516, %v1623
      %v1625 = vrot.slane %v1624, 2
      %v1626 = vadd.f32 %v1624, %v1625
      %v1627 = vrot.slane %v1626, 1
      %v1628 = vadd.f32 %v1626, %v1627
      %v1629 = vrot.slane %v1518, 4
      %v1630 = vadd.f32 %v1518, %v1629
      %v1631 = vrot.slane %v1630, 2
      %v1632 = vadd.f32 %v1630, %v1631
      %v1633 = vrot.slane %v1632, 1
      %v1634 = vadd.f32 %v1632, %v1633
      %v1635 = vrot.slane %v1520, 4
      %v1636 = vadd.f32 %v1520, %v1635
      %v1637 = vrot.slane %v1636, 2
      %v1638 = vadd.f32 %v1636, %v1637
      %v1639 = vrot.slane %v1638, 1
      %v1640 = vadd.f32 %v1638, %v1639
      %v1641 = vrot.slane %v1522, 4
      %v1642 = vadd.f32 %v1522, %v1641
      %v1643 = vrot.slane %v1642, 2
      %v1644 = vadd.f32 %v1642, %v1643
      %v1645 = vrot.slane %v1644, 1
      %v1646 = vadd.f32 %v1644, %v1645
      %v1647 = vrot.slane %v1524, 4
      %v1648 = vadd.f32 %v1524, %v1647
      %v1649 = vrot.slane %v1648, 2
      %v1650 = vadd.f32 %v1648, %v1649
      %v1651 = vrot.slane %v1650, 1
      %v1652 = vadd.f32 %v1650, %v1651
      %v1653 = vrot.slane %v1526, 4
      %v1654 = vadd.f32 %v1526, %v1653
      %v1655 = vrot.slane %v1654, 2
      %v1656 = vadd.f32 %v1654, %v1655
      %v1657 = vrot.slane %v1656, 1
      %v1658 = vadd.f32 %v1656, %v1657
      %v1659 = vrot.slane %v1528, 4
      %v1660 = vadd.f32 %v1528, %v1659
      %v1661 = vrot.slane %v1660, 2
      %v1662 = vadd.f32 %v1660, %v1661
      %v1663 = vrot.slane %v1662, 1
      %v1664 = vadd.f32 %v1662, %v1663
      %v1665 = vrot.slane %v1530, 4
      %v1666 = vadd.f32 %v1530, %v1665
      %v1667 = vrot.slane %v1666, 2
      %v1668 = vadd.f32 %v1666, %v1667
      %v1669 = vrot.slane %v1668, 1
      %v1670 = vadd.f32 %v1668, %v1669
      %v1671 = vrot.slane %v1532, 4
      %v1672 = vadd.f32 %v1532, %v1671
      %v1673 = vrot.slane %v1672, 2
      %v1674 = vadd.f32 %v1672, %v1673
      %v1675 = vrot.slane %v1674, 1
      %v1676 = vadd.f32 %v1674, %v1675
      %v1677 = vrot.slane %v1534, 4
      %v1678 = vadd.f32 %v1534, %v1677
      %v1679 = vrot.slane %v1678, 2
      %v1680 = vadd.f32 %v1678, %v1679
      %v1681 = vrot.slane %v1680, 1
      %v1682 = vadd.f32 %v1680, %v1681
      %v1683 = vrot.slane %v1536, 4
      %v1684 = vadd.f32 %v1536, %v1683
      %v1685 = vrot.slane %v1684, 2
      %v1686 = vadd.f32 %v1684, %v1685
      %v1687 = vrot.slane %v1686, 1
      %v1688 = vadd.f32 %v1686, %v1687
      %v1689 = vrot.slane %v1538, 4
      %v1690 = vadd.f32 %v1538, %v1689
      %v1691 = vrot.slane %v1690, 2
      %v1692 = vadd.f32 %v1690, %v1691
      %v1693 = vrot.slane %v1692, 1
      %v1694 = vadd.f32 %v1692, %v1693
      %v1695 = vrot.slane %v1540, 4
      %v1696 = vadd.f32 %v1540, %v1695
      %v1697 = vrot.slane %v1696, 2
      %v1698 = vadd.f32 %v1696, %v1697
      %v1699 = vrot.slane %v1698, 1
      %v1700 = vadd.f32 %v1698, %v1699
      %v1701 = vrot.slane %v1542, 4
      %v1702 = vadd.f32 %v1542, %v1701
      %v1703 = vrot.slane %v1702, 2
      %v1704 = vadd.f32 %v1702, %v1703
      %v1705 = vrot.slane %v1704, 1
      %v1706 = vadd.f32 %v1704, %v1705
      %v1707 = vrot.slane %v1544, 4
      %v1708 = vadd.f32 %v1544, %v1707
      %v1709 = vrot.slane %v1708, 2
      %v1710 = vadd.f32 %v1708, %v1709
      %v1711 = vrot.slane %v1710, 1
      %v1712 = vadd.f32 %v1710, %v1711
      %v1713 = vrot.slane %v1546, 4
      %v1714 = vadd.f32 %v1546, %v1713
      %v1715 = vrot.slane %v1714, 2
      %v1716 = vadd.f32 %v1714, %v1715
      %v1717 = vrot.slane %v1716, 1
      %v1718 = vadd.f32 %v1716, %v1717
      %v1719 = vrot.slane %v1548, 4
      %v1720 = vadd.f32 %v1548, %v1719
      %v1721 = vrot.slane %v1720, 2
      %v1722 = vadd.f32 %v1720, %v1721
      %v1723 = vrot.slane %v1722, 1
      %v1724 = vadd.f32 %v1722, %v1723
      %v1725 = vrot.slane %v1550, 4
      %v1726 = vadd.f32 %v1550, %v1725
      %v1727 = vrot.slane %v1726, 2
      %v1728 = vadd.f32 %v1726, %v1727
      %v1729 = vrot.slane %v1728, 1
      %v1730 = vadd.f32 %v1728, %v1729
      %v1731 = vrot.slane %v1552, 4
      %v1732 = vadd.f32 %v1552, %v1731
      %v1733 = vrot.slane %v1732, 2
      %v1734 = vadd.f32 %v1732, %v1733
      %v1735 = vrot.slane %v1734, 1
      %v1736 = vadd.f32 %v1734, %v1735
      %v1737 = vrot.slane %v1554, 4
      %v1738 = vadd.f32 %v1554, %v1737
      %v1739 = vrot.slane %v1738, 2
      %v1740 = vadd.f32 %v1738, %v1739
      %v1741 = vrot.slane %v1740, 1
      %v1742 = vadd.f32 %v1740, %v1741
      %v1743 = vrot.slane %v1556, 4
      %v1744 = vadd.f32 %v1556, %v1743
      %v1745 = vrot.slane %v1744, 2
      %v1746 = vadd.f32 %v1744, %v1745
      %v1747 = vrot.slane %v1746, 1
      %v1748 = vadd.f32 %v1746, %v1747
      %v1749 = vrcp.pop %v1562
      %v1750 = vrcp.pop %v1568
      %v1751 = vrcp.pop %v1574
      %v1752 = vrcp.pop %v1580
      %v1753 = vrcp.pop %v1586
      %v1754 = vrcp.pop %v1592
      %v1755 = vrcp.pop %v1598
      %v1756 = vrcp.pop %v1604
      %v1757 = vrcp.pop %v1610
      %v1758 = vrcp.pop %v1616
      %v1759 = vrcp.pop %v1622
      %v1760 = vrcp.pop %v1628
      %v1761 = vrcp.pop %v1634
      %v1762 = vrcp.pop %v1640
      %v1763 = vrcp.pop %v1646
      %v1764 = vrcp.pop %v1652
      %v1765 = vrcp.pop %v1658
      %v1766 = vrcp.pop %v1664
      %v1767 = vrcp.pop %v1670
      %v1768 = vrcp.pop %v1676
      %v1769 = vrcp.pop %v1682
      %v1770 = vrcp.pop %v1688
      %v1771 = vrcp.pop %v1694
      %v1772 = vrcp.pop %v1700
      %v1773 = vrcp.pop %v1706
      %v1774 = vrcp.pop %v1712
      %v1775 = vrcp.pop %v1718
      %v1776 = vrcp.pop %v1724
      %v1777 = vrcp.pop %v1730
      %v1778 = vrcp.pop %v1736
      %v1779 = vrcp.pop %v1742
      %v1780 = vrcp.pop %v1748
      %v1781 = vmul.f32 %v1494, %v1749
      %v1782 = vmul.f32 %v1496, %v1750
      %v1783 = vmul.f32 %v1498, %v1751
      %v1784 = vmul.f32 %v1500, %v1752
      %v1785 = vmul.f32 %v1502, %v1753
      %v1786 = vmul.f32 %v1504, %v1754
      %v1787 = vmul.f32 %v1506, %v1755
      %v1788 = vmul.f32 %v1508, %v1756
      %v1789 = vmul.f32 %v1510, %v1757
      %v1790 = vmul.f32 %v1512, %v1758
      %v1791 = vmul.f32 %v1514, %v1759
      %v1792 = vmul.f32 %v1516, %v1760
      %v1793 = vmul.f32 %v1518, %v1761
      %v1794 = vmul.f32 %v1520, %v1762
      %v1795 = vmul.f32 %v1522, %v1763
      %v1796 = vmul.f32 %v1524, %v1764
      %v1797 = vmul.f32 %v1526, %v1765
      %v1798 = vmul.f32 %v1528, %v1766
      %v1799 = vmul.f32 %v1530, %v1767
      %v1800 = vmul.f32 %v1532, %v1768
      %v1801 = vmul.f32 %v1534, %v1769
      %v1802 = vmul.f32 %v1536, %v1770
      %v1803 = vmul.f32 %v1538, %v1771
      %v1804 = vmul.f32 %v1540, %v1772
      %v1805 = vmul.f32 %v1542, %v1773
      %v1806 = vmul.f32 %v1544, %v1774
      %v1807 = vmul.f32 %v1546, %v1775
      %v1808 = vmul.f32 %v1548, %v1776
      %v1809 = vmul.f32 %v1550, %v1777
      %v1810 = vmul.f32 %v1552, %v1778
      %v1811 = vmul.f32 %v1554, %v1779
      %v1812 = vmul.f32 %v1556, %v1780
      %v1813 = vmul.f32 %v1781, %v223
      %v1814 = vmul.f32 %v1782, %v224
      %v1815 = vmul.f32 %v1783, %v225
      %v1816 = vmul.f32 %v1784, %v226
      %v1817 = vmul.f32 %v1785, %v227
      %v1818 = vmul.f32 %v1786, %v228
      %v1819 = vmul.f32 %v1787, %v229
      %v1820 = vmul.f32 %v1788, %v230
      %v1821 = vmul.f32 %v1789, %v231
      %v1822 = vmul.f32 %v1790, %v232
      %v1823 = vmul.f32 %v1791, %v233
      %v1824 = vmul.f32 %v1792, %v234
      %v1825 = vmul.f32 %v1793, %v235
      %v1826 = vmul.f32 %v1794, %v236
      %v1827 = vmul.f32 %v1795, %v237
      %v1828 = vmul.f32 %v1796, %v238
      %v1829 = vmul.f32 %v1797, %v239
      %v1830 = vmul.f32 %v1798, %v240
      %v1831 = vmul.f32 %v1799, %v241
      %v1832 = vmul.f32 %v1800, %v242
      %v1833 = vmul.f32 %v1801, %v243
      %v1834 = vmul.f32 %v1802, %v244
      %v1835 = vmul.f32 %v1803, %v245
      %v1836 = vmul.f32 %v1804, %v246
      %v1837 = vmul.f32 %v1805, %v247
      %v1838 = vmul.f32 %v1806, %v248
      %v1839 = vmul.f32 %v1807, %v249
      %v1840 = vmul.f32 %v1808, %v250
      %v1841 = vmul.f32 %v1809, %v251
      %v1842 = vmul.f32 %v1810, %v252
      %v1843 = vmul.f32 %v1811, %v253
      %v1844 = vmul.f32 %v1812, %v254
      %v1845 = vsel %vm271, %v1813, 0.0
      %v1846 = vrot.slane %v1845, 4
      %v1847 = vadd.f32 %v1845, %v1846
      %v1848 = vrot.slane %v1847, 2
      %v1849 = vadd.f32 %v1847, %v1848
      %v1850 = vrot.slane %v1849, 1
      %v1851 = vadd.f32 %v1849, %v1850
      %v1852 = vsel %vm271, %v1814, 0.0
      %v1853 = vrot.slane %v1852, 4
      %v1854 = vadd.f32 %v1852, %v1853
      %v1855 = vrot.slane %v1854, 2
      %v1856 = vadd.f32 %v1854, %v1855
      %v1857 = vrot.slane %v1856, 1
      %v1858 = vadd.f32 %v1856, %v1857
      %v1859 = vsel %vm271, %v1815, 0.0
      %v1860 = vrot.slane %v1859, 4
      %v1861 = vadd.f32 %v1859, %v1860
      %v1862 = vrot.slane %v1861, 2
      %v1863 = vadd.f32 %v1861, %v1862
      %v1864 = vrot.slane %v1863, 1
      %v1865 = vadd.f32 %v1863, %v1864
      %v1866 = vsel %vm271, %v1816, 0.0
      %v1867 = vrot.slane %v1866, 4
      %v1868 = vadd.f32 %v1866, %v1867
      %v1869 = vrot.slane %v1868, 2
      %v1870 = vadd.f32 %v1868, %v1869
      %v1871 = vrot.slane %v1870, 1
      %v1872 = vadd.f32 %v1870, %v1871
      %v1873 = vsel %vm271, %v1817, 0.0
      %v1874 = vrot.slane %v1873, 4
      %v1875 = vadd.f32 %v1873, %v1874
      %v1876 = vrot.slane %v1875, 2
      %v1877 = vadd.f32 %v1875, %v1876
      %v1878 = vrot.slane %v1877, 1
      %v1879 = vadd.f32 %v1877, %v1878
      %v1880 = vsel %vm271, %v1818, 0.0
      %v1881 = vrot.slane %v1880, 4
      %v1882 = vadd.f32 %v1880, %v1881
      %v1883 = vrot.slane %v1882, 2
      %v1884 = vadd.f32 %v1882, %v1883
      %v1885 = vrot.slane %v1884, 1
      %v1886 = vadd.f32 %v1884, %v1885
      %v1887 = vsel %vm271, %v1819, 0.0
      %v1888 = vrot.slane %v1887, 4
      %v1889 = vadd.f32 %v1887, %v1888
      %v1890 = vrot.slane %v1889, 2
      %v1891 = vadd.f32 %v1889, %v1890
      %v1892 = vrot.slane %v1891, 1
      %v1893 = vadd.f32 %v1891, %v1892
      %v1894 = vsel %vm271, %v1820, 0.0
      %v1895 = vrot.slane %v1894, 4
      %v1896 = vadd.f32 %v1894, %v1895
      %v1897 = vrot.slane %v1896, 2
      %v1898 = vadd.f32 %v1896, %v1897
      %v1899 = vrot.slane %v1898, 1
      %v1900 = vadd.f32 %v1898, %v1899
      %v1901 = vsel %vm271, %v1821, 0.0
      %v1902 = vrot.slane %v1901, 4
      %v1903 = vadd.f32 %v1901, %v1902
      %v1904 = vrot.slane %v1903, 2
      %v1905 = vadd.f32 %v1903, %v1904
      %v1906 = vrot.slane %v1905, 1
      %v1907 = vadd.f32 %v1905, %v1906
      %v1908 = vsel %vm271, %v1822, 0.0
      %v1909 = vrot.slane %v1908, 4
      %v1910 = vadd.f32 %v1908, %v1909
      %v1911 = vrot.slane %v1910, 2
      %v1912 = vadd.f32 %v1910, %v1911
      %v1913 = vrot.slane %v1912, 1
      %v1914 = vadd.f32 %v1912, %v1913
      %v1915 = vsel %vm271, %v1823, 0.0
      %v1916 = vrot.slane %v1915, 4
      %v1917 = vadd.f32 %v1915, %v1916
      %v1918 = vrot.slane %v1917, 2
      %v1919 = vadd.f32 %v1917, %v1918
      %v1920 = vrot.slane %v1919, 1
      %v1921 = vadd.f32 %v1919, %v1920
      %v1922 = vsel %vm271, %v1824, 0.0
      %v1923 = vrot.slane %v1922, 4
      %v1924 = vadd.f32 %v1922, %v1923
      %v1925 = vrot.slane %v1924, 2
      %v1926 = vadd.f32 %v1924, %v1925
      %v1927 = vrot.slane %v1926, 1
      %v1928 = vadd.f32 %v1926, %v1927
      %v1929 = vsel %vm271, %v1825, 0.0
      %v1930 = vrot.slane %v1929, 4
      %v1931 = vadd.f32 %v1929, %v1930
      %v1932 = vrot.slane %v1931, 2
      %v1933 = vadd.f32 %v1931, %v1932
      %v1934 = vrot.slane %v1933, 1
      %v1935 = vadd.f32 %v1933, %v1934
      %v1936 = vsel %vm271, %v1826, 0.0
      %v1937 = vrot.slane %v1936, 4
      %v1938 = vadd.f32 %v1936, %v1937
      %v1939 = vrot.slane %v1938, 2
      %v1940 = vadd.f32 %v1938, %v1939
      %v1941 = vrot.slane %v1940, 1
      %v1942 = vadd.f32 %v1940, %v1941
      %v1943 = vsel %vm271, %v1827, 0.0
      %v1944 = vrot.slane %v1943, 4
      %v1945 = vadd.f32 %v1943, %v1944
      %v1946 = vrot.slane %v1945, 2
      %v1947 = vadd.f32 %v1945, %v1946
      %v1948 = vrot.slane %v1947, 1
      %v1949 = vadd.f32 %v1947, %v1948
      %v1950 = vsel %vm271, %v1828, 0.0
      %v1951 = vrot.slane %v1950, 4
      %v1952 = vadd.f32 %v1950, %v1951
      %v1953 = vrot.slane %v1952, 2
      %v1954 = vadd.f32 %v1952, %v1953
      %v1955 = vrot.slane %v1954, 1
      %v1956 = vadd.f32 %v1954, %v1955
      %v1957 = vsel %vm271, %v1829, 0.0
      %v1958 = vrot.slane %v1957, 4
      %v1959 = vadd.f32 %v1957, %v1958
      %v1960 = vrot.slane %v1959, 2
      %v1961 = vadd.f32 %v1959, %v1960
      %v1962 = vrot.slane %v1961, 1
      %v1963 = vadd.f32 %v1961, %v1962
      %v1964 = vsel %vm271, %v1830, 0.0
      %v1965 = vrot.slane %v1964, 4
      %v1966 = vadd.f32 %v1964, %v1965
      %v1967 = vrot.slane %v1966, 2
      %v1968 = vadd.f32 %v1966, %v1967
      %v1969 = vrot.slane %v1968, 1
      %v1970 = vadd.f32 %v1968, %v1969
      %v1971 = vsel %vm271, %v1831, 0.0
      %v1972 = vrot.slane %v1971, 4
      %v1973 = vadd.f32 %v1971, %v1972
      %v1974 = vrot.slane %v1973, 2
      %v1975 = vadd.f32 %v1973, %v1974
      %v1976 = vrot.slane %v1975, 1
      %v1977 = vadd.f32 %v1975, %v1976
      %v1978 = vsel %vm271, %v1832, 0.0
      %v1979 = vrot.slane %v1978, 4
      %v1980 = vadd.f32 %v1978, %v1979
      %v1981 = vrot.slane %v1980, 2
      %v1982 = vadd.f32 %v1980, %v1981
      %v1983 = vrot.slane %v1982, 1
      %v1984 = vadd.f32 %v1982, %v1983
      %v1985 = vsel %vm271, %v1833, 0.0
      %v1986 = vrot.slane %v1985, 4
      %v1987 = vadd.f32 %v1985, %v1986
      %v1988 = vrot.slane %v1987, 2
      %v1989 = vadd.f32 %v1987, %v1988
      %v1990 = vrot.slane %v1989, 1
      %v1991 = vadd.f32 %v1989, %v1990
      %v1992 = vsel %vm271, %v1834, 0.0
      %v1993 = vrot.slane %v1992, 4
      %v1994 = vadd.f32 %v1992, %v1993
      %v1995 = vrot.slane %v1994, 2
      %v1996 = vadd.f32 %v1994, %v1995
      %v1997 = vrot.slane %v1996, 1
      %v1998 = vadd.f32 %v1996, %v1997
      %v1999 = vsel %vm271, %v1835, 0.0
      %v2000 = vrot.slane %v1999, 4
      %v2001 = vadd.f32 %v1999, %v2000
      %v2002 = vrot.slane %v2001, 2
      %v2003 = vadd.f32 %v2001, %v2002
      %v2004 = vrot.slane %v2003, 1
      %v2005 = vadd.f32 %v2003, %v2004
      %v2006 = vsel %vm271, %v1836, 0.0
      %v2007 = vrot.slane %v2006, 4
      %v2008 = vadd.f32 %v2006, %v2007
      %v2009 = vrot.slane %v2008, 2
      %v2010 = vadd.f32 %v2008, %v2009
      %v2011 = vrot.slane %v2010, 1
      %v2012 = vadd.f32 %v2010, %v2011
      %v2013 = vsel %vm271, %v1837, 0.0
      %v2014 = vrot.slane %v2013, 4
      %v2015 = vadd.f32 %v2013, %v2014
      %v2016 = vrot.slane %v2015, 2
      %v2017 = vadd.f32 %v2015, %v2016
      %v2018 = vrot.slane %v2017, 1
      %v2019 = vadd.f32 %v2017, %v2018
      %v2020 = vsel %vm271, %v1838, 0.0
      %v2021 = vrot.slane %v2020, 4
      %v2022 = vadd.f32 %v2020, %v2021
      %v2023 = vrot.slane %v2022, 2
      %v2024 = vadd.f32 %v2022, %v2023
      %v2025 = vrot.slane %v2024, 1
      %v2026 = vadd.f32 %v2024, %v2025
      %v2027 = vsel %vm271, %v1839, 0.0
      %v2028 = vrot.slane %v2027, 4
      %v2029 = vadd.f32 %v2027, %v2028
      %v2030 = vrot.slane %v2029, 2
      %v2031 = vadd.f32 %v2029, %v2030
      %v2032 = vrot.slane %v2031, 1
      %v2033 = vadd.f32 %v2031, %v2032
      %v2034 = vsel %vm271, %v1840, 0.0
      %v2035 = vrot.slane %v2034, 4
      %v2036 = vadd.f32 %v2034, %v2035
      %v2037 = vrot.slane %v2036, 2
      %v2038 = vadd.f32 %v2036, %v2037
      %v2039 = vrot.slane %v2038, 1
      %v2040 = vadd.f32 %v2038, %v2039
      %v2041 = vsel %vm271, %v1841, 0.0
      %v2042 = vrot.slane %v2041, 4
      %v2043 = vadd.f32 %v2041, %v2042
      %v2044 = vrot.slane %v2043, 2
      %v2045 = vadd.f32 %v2043, %v2044
      %v2046 = vrot.slane %v2045, 1
      %v2047 = vadd.f32 %v2045, %v2046
      %v2048 = vsel %vm271, %v1842, 0.0
      %v2049 = vrot.slane %v2048, 4
      %v2050 = vadd.f32 %v2048, %v2049
      %v2051 = vrot.slane %v2050, 2
      %v2052 = vadd.f32 %v2050, %v2051
      %v2053 = vrot.slane %v2052, 1
      %v2054 = vadd.f32 %v2052, %v2053
      %v2055 = vsel %vm271, %v1843, 0.0
      %v2056 = vrot.slane %v2055, 4
      %v2057 = vadd.f32 %v2055, %v2056
      %v2058 = vrot.slane %v2057, 2
      %v2059 = vadd.f32 %v2057, %v2058
      %v2060 = vrot.slane %v2059, 1
      %v2061 = vadd.f32 %v2059, %v2060
      %v2062 = vsel %vm271, %v1844, 0.0
      %v2063 = vrot.slane %v2062, 4
      %v2064 = vadd.f32 %v2062, %v2063
      %v2065 = vrot.slane %v2064, 2
      %v2066 = vadd.f32 %v2064, %v2065
      %v2067 = vrot.slane %v2066, 1
      %v2068 = vadd.f32 %v2066, %v2067
      %vm2101 = vcmask 1041409
      %v2102 = vsel %vm2101, %v1858, %v1851
      %vm2103 = vcmask 1042434
      %v2104 = vsel %vm2103, %v1865, %v2102
      %vm2105 = vcmask 1043459
      %v2106 = vsel %vm2105, %v1872, %v2104
      %vm2107 = vcmask 1044484
      %v2108 = vsel %vm2107, %v1879, %v2106
      %vm2109 = vcmask 1045509
      %v2110 = vsel %vm2109, %v1886, %v2108
      %vm2111 = vcmask 1046534
      %v2112 = vsel %vm2111, %v1893, %v2110
      %vm2113 = vcmask 1047559
      %v2114 = vsel %vm2113, %v1900, %v2112
      %v2115 = vsel %vm2101, %v1914, %v1907
      %v2116 = vsel %vm2103, %v1921, %v2115
      %v2117 = vsel %vm2105, %v1928, %v2116
      %v2118 = vsel %vm2107, %v1935, %v2117
      %v2119 = vsel %vm2109, %v1942, %v2118
      %v2120 = vsel %vm2111, %v1949, %v2119
      %v2121 = vsel %vm2113, %v1956, %v2120
      %v2122 = vsel %vm2101, %v1970, %v1963
      %v2123 = vsel %vm2103, %v1977, %v2122
      %v2124 = vsel %vm2105, %v1984, %v2123
      %v2125 = vsel %vm2107, %v1991, %v2124
      %v2126 = vsel %vm2109, %v1998, %v2125
      %v2127 = vsel %vm2111, %v2005, %v2126
      %v2128 = vsel %vm2113, %v2012, %v2127
      %v2129 = vsel %vm2101, %v2026, %v2019
      %v2130 = vsel %vm2103, %v2033, %v2129
      %v2131 = vsel %vm2105, %v2040, %v2130
      %v2132 = vsel %vm2107, %v2047, %v2131
      %v2133 = vsel %vm2109, %v2054, %v2132
      %v2134 = vsel %vm2111, %v2061, %v2133
      %v2135 = vsel %vm2113, %v2068, %v2134
      %2140 = vst.msk [vmem:[%s221] sm:$0xff] %vm271, %v2114
      %2141 = vst.msk [vmem:[%s221 + $0x8] sm:$0xff] %vm271, %v2121
      %2142 = vst.msk [vmem:[%s221 + $0x10] sm:$0xff] %vm271, %v2128
      %2143 = vst.msk [vmem:[%s221 + $0x18] sm:$0xff] %vm271, %v2135
      %s2144 = smul.u32 4, %s15
      %p2145 = scmp.lt.s32.totalorder %s2144, 7
      %s2146 = scalar_select %p2145, %s2144, 7
      %s2147 = smul.addr %s2146, 8
      %s2148 = scalar_lea.vmem %s4, %s2147
      // Predicated region
      $region37: #{tpu_custom_call.1} parent=35 // pred_check
        %p2149 = pneg %p127
      $region38: #{tpu_custom_call.1} parent=35 // pred_check_branch
        %2151 = sbr.rel (%p2149) target = $region40
      $region39: #{tpu_custom_call.1} parent=35 // pred_region
        %s2152 = smul.u32 4, %s15
      $region40: #{tpu_custom_call.1} parent=35 // pred_fallthru
        _
    $region36: #{tpu_custom_call.1} parent=5 // pred_fallthru
      _
    %p2153 = scmp.le.s32.totalorder 2, %s10
    // Predicated region
    $region41: #{tpu_custom_call.1} parent=5 // pred_check
      %p2154 = pneg %p2153
    $region42: #{tpu_custom_call.1} parent=5 // pred_check_branch
      %2156 = sbr.rel (%p2154) target = $region44
    $region43: #{tpu_custom_call.1} parent=5 // pred_region
      %s2157 = ssub.s32 %s10, 2
      // Predicated region
      $region45: #{tpu_custom_call.1} parent=43 // pred_check
        %p2158 = pneg %p133
      $region46: #{tpu_custom_call.1} parent=43 // pred_check_branch
        %2160 = sbr.rel (%p2158) target = $region48
      $region47: #{tpu_custom_call.1} parent=43 // pred_region
        %s2161 = smul.u32 4, %s16
        %p2162 = scmp.lt.s32.totalorder %s2161, 7
        %s2163 = scalar_select %p2162, %s2161, 7
        %s2164 = smul.addr %s2163, 8
        %s2165 = scalar_lea.vmem %s4, %s2164
      $region48: #{tpu_custom_call.1} parent=43 // pred_fallthru
        _
    $region44: #{tpu_custom_call.1} parent=5 // pred_fallthru
      _
  $region6: #{tpu_custom_call.1} parent=0 // loop_footer
    %s14 = sadd.s32 1, %s10
  $region7: #{tpu_custom_call.1} parent=0 // loop_footer_branch
    %9 = sbr.rel target = $region3
  $region8: #{tpu_custom_call.1} parent=0 // loop_exit
    _

</llo_original>
